<compile_context>
chip_gen: v7x
topology: tpu7x:2x2x1
jax: 0.10.0
libtpu: 0.0.40
codegen_flags: <defaults>
</compile_context>

<pallas_src>
import jax
import jax.numpy as jnp
from jax.experimental import pallas as pl
from jax.experimental.pallas import tpu as pltpu


_STATS_LANES = 128  # lane-dense scalar-results row


# ---------------------------------------------------------------------------
# Fused Pallas kernel (grid = (2,) over deformation stages)
# ---------------------------------------------------------------------------

def _p2m_fused_kernel(gt_ref, gt_nrm_t_ref, pred_t_ref, adj0_ref, adj1_ref,
                      gt_ediff_ref, img_gt_ref, img_pred_ref, stats_ref):
    """Per-stage chamfer + edge/normal reductions + BCE sum.

    gt_ref:       (Ng, 3)    f32  gt points            (stage-invariant, resident)
    gt_nrm_t_ref: (3, Ng)    f32  gt normals^T         (resident)
    pred_t_ref:   (1, 3, Np) f32  pred points^T        (one stage per grid step)
    adj0_ref:     (1, Et)    i32  pred edge endpoint 0 (resident)
    adj1_ref:     (1, Et)    i32  pred edge endpoint 1 (resident)
    gt_ediff_ref: (3, Eg)    f32  gt edge vectors^T    (resident)
    img_gt_ref:   (R, 128)   f32  gt image slab        (resident)
    img_pred_ref: (R, 128)   f32  reconst image slab   (resident)
    stats_ref:    (1, 1, 128) f32 lane-dense scalar results
    """
    g = gt_ref[...]                    # (Ng, 3)
    gnt = gt_nrm_t_ref[...]            # (3, Ng)
    pt = pred_t_ref[0]                 # (3, Np)
    a0 = adj0_ref[...]                 # (1, Et)
    a1 = adj1_ref[...]                 # (1, Et)
    ge = gt_ediff_ref[...]             # (3, Eg)

    ng = g.shape[0]
    npd = pt.shape[1]
    et = a0.shape[1]

    # --- chamfer: squared pairwise distances via the MXU -----------------
    gsq = jnp.sum(g * g, axis=1, keepdims=True)                     # (Ng, 1)
    psq = jnp.sum(pt * pt, axis=0, keepdims=True)                   # (1, Np)
    cross = jnp.dot(g, pt, preferred_element_type=jnp.float32)      # (Ng, Np) MXU
    d = jnp.maximum(gsq + psq - 2.0 * cross, 0.0)                   # (Ng, Np)

    d1 = jnp.min(d, axis=1, keepdims=True)                          # (Ng, 1)
    d2 = jnp.min(d, axis=0, keepdims=True)                          # (1, Np)
    mean_d1 = jnp.sum(d1, keepdims=True) * (1.0 / ng)               # (1, 1)
    mean_d2 = jnp.sum(d2, keepdims=True) * (1.0 / npd)              # (1, 1)

    # exact argmin(axis=0) one-hot (first index on ties, like torch argmin)
    giota = jax.lax.broadcasted_iota(jnp.int32, (ng, npd), 0)
    i2 = jnp.min(jnp.where(d == d2, giota, ng), axis=0, keepdims=True)  # (1, Np)
    onehot2 = jnp.where(giota == i2, 1.0, 0.0)                      # (Ng, Np)

    # nearest gt normal per pred point (transposed): nn_t[:, p] = gt_nrm[idx2[p]]
    nn_t = jnp.dot(gnt, onehot2, preferred_element_type=jnp.float32)  # (3, Np)

    # --- edge & normal losses via selection matmuls ------------------------
    piota = jax.lax.broadcasted_iota(jnp.int32, (npd, et), 0)
    sel0 = jnp.where(piota == a0, 1.0, 0.0)                         # (Np, Et)
    sel1 = jnp.where(piota == a1, 1.0, 0.0)                         # (Np, Et)

    # pred edge vectors pred[e0]-pred[e1], transposed (3, Et).  NOTE: matches
    # the PyTorch reference, which computes but DISCARDS F.normalize(edges).
    ediff_t = jnp.dot(pt, sel0 - sel1, preferred_element_type=jnp.float32)
    # gathered nearest gt normals at edge endpoint 0, transposed (3, Et)
    nrm_e_t = jnp.dot(nn_t, sel0, preferred_element_type=jnp.float32)

    reg1_sum = jnp.sum(ediff_t * ediff_t, keepdims=True)            # (1, 1)

    nsq = jnp.sum(nrm_e_t * nrm_e_t, axis=0, keepdims=True)         # (1, Et)
    # 1 / max(||n||, 1e-12) == rsqrt(max(||n||^2, 1e-24)); rsqrt runs on EUP.
    rinv = jax.lax.rsqrt(jnp.maximum(nsq, 1e-24))
    dotv = jnp.sum(ediff_t * nrm_e_t, axis=0, keepdims=True)        # (1, Et)
    cos_sum = jnp.sum(jnp.abs(dotv) * rinv, keepdims=True)          # (1, 1)

    reg2_sum = jnp.sum(ge * ge, keepdims=True)                      # (1, 1)

    # --- BCE sum (slab is tiny and resident; recomputed per stage is free) -
    gi = img_gt_ref[...]
    pi = img_pred_ref[...]
    logp = jnp.maximum(jnp.log(pi), -100.0)        # torch clamps log terms at -100
    log1mp = jnp.maximum(jnp.log(1.0 - pi), -100.0)
    bce_sum = jnp.sum(-(gi * logp + (1.0 - gi) * log1mp), keepdims=True)

    lane = jax.lax.broadcasted_iota(jnp.int32, (1, 1, _STATS_LANES), 2)
    stats_ref[...] = (jnp.where(lane == 0, mean_d1, 0.0)
                      + jnp.where(lane == 1, mean_d2, 0.0)
                      + jnp.where(lane == 2, reg1_sum, 0.0)
                      + jnp.where(lane == 3, cos_sum, 0.0)
                      + jnp.where(lane == 4, reg2_sum, 0.0)
                      + jnp.where(lane == 5, bce_sum, 0.0))


# ---------------------------------------------------------------------------
# Pallas wrapper
# ---------------------------------------------------------------------------

def p2m_stats_pallas(gt_pts, gt_nrm, pred, this_adj, gt_ediff,
                     img_gt2d, img_pred2d):
    """Returns (S, 128) stats rows (see lane layout in the kernel docstring)."""
    s, npd, _ = pred.shape
    ng = gt_pts.shape[0]
    et = this_adj.shape[0]
    eg = gt_ediff.shape[0]
    rows = img_gt2d.shape[0]

    pred_t = jnp.transpose(pred, (0, 2, 1))                          # (S, 3, Np)
    gt_nrm_t = jnp.transpose(gt_nrm)                                 # (3, Ng)
    gt_ediff_t = jnp.transpose(gt_ediff)                             # (3, Eg)
    adj0 = this_adj[:, 0].astype(jnp.int32).reshape(1, et)           # (1, Et)
    adj1 = this_adj[:, 1].astype(jnp.int32).reshape(1, et)           # (1, Et)

    stats = pl.pallas_call(
        _p2m_fused_kernel,
        out_shape=jax.ShapeDtypeStruct((s, 1, _STATS_LANES), jnp.float32),
        grid=(s,),
        in_specs=[
            pl.BlockSpec((ng, 3), lambda i: (0, 0)),          # gt points (resident)
            pl.BlockSpec((3, ng), lambda i: (0, 0)),          # gt normals^T
            pl.BlockSpec((1, 3, npd), lambda i: (i, 0, 0)),   # pred^T per stage
            pl.BlockSpec((1, et), lambda i: (0, 0)),          # edge endpoint 0
            pl.BlockSpec((1, et), lambda i: (0, 0)),          # edge endpoint 1
            pl.BlockSpec((3, eg), lambda i: (0, 0)),          # gt edge vectors^T
            pl.BlockSpec((rows, 128), lambda i: (0, 0)),      # gt image slab
            pl.BlockSpec((rows, 128), lambda i: (0, 0)),      # reconst slab
        ],
        out_specs=pl.BlockSpec((1, 1, _STATS_LANES), lambda i: (i, 0, 0)),
        compiler_params=pltpu.CompilerParams(
            dimension_semantics=("parallel",)),   # one stage per TC on v7x
    )(gt_pts, gt_nrm_t, pred_t, adj0, adj1, gt_ediff_t, img_gt2d, img_pred2d)
    return stats[:, 0, :]


# ---------------------------------------------------------------------------
# P2MLoss forward (thin JAX glue around the single Pallas kernel)
# ---------------------------------------------------------------------------

class Weights:
    """Deterministic, in-script weight config (mirrors options.weights)."""
    chamfer = (1.0, 0.55)
    chamfer_opposite = 0.55
    edge = 0.1
    normal = 1.6e-4
    laplace = 0.5
    move = 0.1
    constant = 1.0
    reconst = 0.1


def p2m_loss_forward(outputs, this_mesh, next_mesh, gt_images, weights=Weights):
    gt_coord = next_mesh['vert']        # (1, Ng, 3)
    gt_normal = next_mesh['norm']       # (1, Ng, 3)
    gt_edges = next_mesh['edge']        # (1, Eg, 2)
    this_edges = this_mesh['edge']      # (1, Et, 2)
    pred_coord = outputs['pred_coord']  # (2, Np, 3)
    reconst = outputs['reconst']        # (B, C, H, W) or None

    gt_pts = jnp.squeeze(gt_coord, axis=0).astype(jnp.float32)     # (Ng, 3)
    gt_nrm = jnp.squeeze(gt_normal, axis=0).astype(jnp.float32)    # (Ng, 3)
    gt_adj = jnp.squeeze(gt_edges, axis=0)                         # (Eg, 2)
    this_adj = jnp.squeeze(this_edges, axis=0)                     # (Et, 2)
    pred = pred_coord.astype(jnp.float32)                          # (2, Np, 3)

    et = this_adj.shape[0]
    eg = gt_adj.shape[0]

    # loop-invariant gt edge vectors (tiny XLA gather, computed once)
    gt_ediff = (jnp.take(gt_pts, gt_adj[:, 0], axis=0)
                - jnp.take(gt_pts, gt_adj[:, 1], axis=0))          # (Eg, 3)

    # image slab: flatten & pad to a lane-dense (R, 128) grid; padding pairs
    # (gt=1, pred=1) contribute exactly zero BCE.
    use_image = (reconst is not None) and (weights.reconst != 0)
    if use_image:
        total = int(gt_images.size)
        pad = (-total) % 128
        g_flat = gt_images.astype(jnp.float32).reshape(-1)
        p_flat = reconst.astype(jnp.float32).reshape(-1)
        if pad:
            ones = jnp.ones((pad,), jnp.float32)
            g_flat = jnp.concatenate([g_flat, ones])
            p_flat = jnp.concatenate([p_flat, ones])
        rows = (total + pad) // 128
        img_gt2d = g_flat.reshape(rows, 128)
        img_pred2d = p_flat.reshape(rows, 128)
    else:
        total = 128
        img_gt2d = jnp.ones((8, 128), jnp.float32)
        img_pred2d = jnp.ones((8, 128), jnp.float32)

    # --- single fused pallas_call over both deformation stages -----------
    stats = p2m_stats_pallas(gt_pts, gt_nrm, pred, this_adj, gt_ediff,
                             img_gt2d, img_pred2d)                  # (2, 128)
    mean_d1 = stats[:, 0]               # (2,)
    mean_d2 = stats[:, 1]               # (2,)
    reg1 = stats[:, 2] / et             # per-stage MSE(pred[e0],pred[e1]) * 3
    cos_sum = stats[:, 3]               # per-stage sum |cos|
    reg2 = stats[0, 4] / eg             # gt edge regularization (stage-invariant)
    image_loss = stats[0, 5] / total if use_image else jnp.float32(0.0)

    # --- combine (matches the PyTorch forward) ----------------------------
    w_ch = jnp.asarray(weights.chamfer, jnp.float32)
    chamfer_loss = jnp.sum(w_ch * (mean_d1 + weights.chamfer_opposite * mean_d2))
    normal_loss = jnp.sum(cos_sum) / et
    edge_loss = jnp.sum((reg1 - reg2) ** 2)       # sum over stages of scalar MSE
    lap_loss = jnp.float32(0.0)    # never updated in the reference forward
    move_loss = jnp.float32(0.0)   # never updated in the reference forward

    loss = (chamfer_loss
            + image_loss * weights.reconst
            + weights.laplace * lap_loss
            + weights.move * move_loss
            + weights.edge * edge_loss
            + weights.normal * normal_loss)
    loss = loss * weights.constant

    summary = {
        'loss': loss,
        'loss_chamfer': chamfer_loss,
        'loss_edge': edge_loss,
        'loss_laplace': lap_loss,
        'loss_move': move_loss,
        'loss_normal': normal_loss,
    }
    return loss, summary


# ---------------------------------------------------------------------------
# Main
# ---------------------------------------------------------------------------

if __name__ == "__main__":
    key = jax.random.PRNGKey(0)
    k1, k2, k3, k4, k5, k6, k7 = jax.random.split(key, 7)

    NG = 128   # gt vertices
    NP = 128   # predicted vertices (per deformation stage)
    ET = 256   # edges of the predicted mesh
    EG = 256   # edges of the gt mesh
    B, C, H, W = 2, 4, 16, 16

    next_mesh = {
        'vert': jax.random.normal(k1, (1, NG, 3), jnp.float32),
        'norm': jax.random.normal(k2, (1, NG, 3), jnp.float32),
        'face': jnp.zeros((1, 1, 3), jnp.int32),    # unused by forward
        'edge': jax.random.randint(k3, (1, EG, 2), 0, NG, jnp.int32),
    }
    this_mesh = {
        'edge': jax.random.randint(k4, (1, ET, 2), 0, NP, jnp.int32),
        'face': jnp.zeros((1, 1, 3), jnp.int32),    # unused by forward
        'norm': jnp.zeros((1, NP, 3), jnp.float32),  # unused by forward
        'lap': jnp.zeros((1, NP, 10), jnp.int32),    # unused (lap_loss stays 0)
    }
    outputs = {
        'pred_coord': jax.random.normal(k5, (2, NP, 3), jnp.float32),
        'pred_coord_before_deform': jax.random.normal(k6, (2, NP, 3), jnp.float32),
        'reconst': jax.nn.sigmoid(jax.random.normal(k7, (B, C, H, W), jnp.float32)),
    }
    gt_images = jax.random.uniform(k1, (B, C, H, W), jnp.float32, 1e-3, 1.0 - 1e-3)

    forward = jax.jit(lambda o, tm, nm, gi: p2m_loss_forward(o, tm, nm, gi))
    loss, summary = forward(outputs, this_mesh, next_mesh, gt_images)
    loss = jax.block_until_ready(loss)
    assert bool(jnp.isfinite(loss)), "loss is not finite"
    print("KERNEL_OK")
</pallas_src>

<mosaic_0001>
module attributes {stable_mosaic.version = 11 : i64} {
  func.func @_p2m_fused_kernel(%arg0: i32, %arg1: memref<128x3xf32, #tpu.memory_space<vmem>>, %arg2: memref<3x128xf32, #tpu.memory_space<vmem>>, %arg3: memref<1x3x128xf32, #tpu.memory_space<vmem>>, %arg4: memref<1x256xi32, #tpu.memory_space<vmem>>, %arg5: memref<1x256xi32, #tpu.memory_space<vmem>>, %arg6: memref<3x256xf32, #tpu.memory_space<vmem>>, %arg7: memref<16x128xf32, #tpu.memory_space<vmem>>, %arg8: memref<16x128xf32, #tpu.memory_space<vmem>>, %arg9: memref<1x1x128xf32, #tpu.memory_space<vmem>>) attributes {dimension_semantics = [#tpu.dimension_semantics<parallel>], iteration_bounds = array<i64: 2>, scalar_prefetch = 0 : i64, scratch_operands = 0 : i64, tpu.core_type = #tpu.core_type<tc>, window_params = [{pipeline_mode = #tpu.pipeline_mode<synchronous>, transform_indices = @transform_0, window_bounds = array<i64: 128, 3>}, {pipeline_mode = #tpu.pipeline_mode<synchronous>, transform_indices = @transform_1, window_bounds = array<i64: 3, 128>}, {transform_indices = @transform_2, window_bounds = array<i64: 1, 3, 128>}, {pipeline_mode = #tpu.pipeline_mode<synchronous>, transform_indices = @transform_3, window_bounds = array<i64: 1, 256>}, {pipeline_mode = #tpu.pipeline_mode<synchronous>, transform_indices = @transform_4, window_bounds = array<i64: 1, 256>}, {pipeline_mode = #tpu.pipeline_mode<synchronous>, transform_indices = @transform_5, window_bounds = array<i64: 3, 256>}, {pipeline_mode = #tpu.pipeline_mode<synchronous>, transform_indices = @transform_6, window_bounds = array<i64: 16, 128>}, {pipeline_mode = #tpu.pipeline_mode<synchronous>, transform_indices = @transform_7, window_bounds = array<i64: 16, 128>}, {transform_indices = @transform_8, window_bounds = array<i64: 1, 1, 128>}]} {
    %c0 = arith.constant 0 : index
    %c0_0 = arith.constant 0 : index
    %0 = vector.load %arg1[%c0, %c0_0] : memref<128x3xf32, #tpu.memory_space<vmem>>, vector<128x3xf32>
    %c0_1 = arith.constant 0 : index
    %c0_2 = arith.constant 0 : index
    %1 = vector.load %arg2[%c0_1, %c0_2] : memref<3x128xf32, #tpu.memory_space<vmem>>, vector<3x128xf32>
    %c0_3 = arith.constant 0 : index
    %c0_4 = arith.constant 0 : index
    %c0_5 = arith.constant 0 : index
    %2 = vector.load %arg3[%c0_3, %c0_4, %c0_5] : memref<1x3x128xf32, #tpu.memory_space<vmem>>, vector<1x3x128xf32>
    %3 = vector.shape_cast %2 : vector<1x3x128xf32> to vector<3x128xf32>
    %c0_6 = arith.constant 0 : index
    %c0_7 = arith.constant 0 : index
    %4 = vector.load %arg4[%c0_6, %c0_7] : memref<1x256xi32, #tpu.memory_space<vmem>>, vector<1x256xi32>
    %c0_8 = arith.constant 0 : index
    %c0_9 = arith.constant 0 : index
    %5 = vector.load %arg5[%c0_8, %c0_9] : memref<1x256xi32, #tpu.memory_space<vmem>>, vector<1x256xi32>
    %c0_10 = arith.constant 0 : index
    %c0_11 = arith.constant 0 : index
    %6 = vector.load %arg6[%c0_10, %c0_11] : memref<3x256xf32, #tpu.memory_space<vmem>>, vector<3x256xf32>
    %7 = arith.mulf %0, %0 : vector<128x3xf32>
    %cst = arith.constant dense<0.000000e+00> : vector<128xf32>
    %8 = vector.multi_reduction <add>, %7, %cst [1] : vector<128x3xf32> to vector<128xf32>
    %9 = vector.shape_cast %8 : vector<128xf32> to vector<128x1xf32>
    %10 = arith.mulf %3, %3 : vector<3x128xf32>
    %cst_12 = arith.constant dense<0.000000e+00> : vector<128xf32>
    %11 = vector.multi_reduction <add>, %10, %cst_12 [0] : vector<3x128xf32> to vector<128xf32>
    %12 = vector.shape_cast %11 : vector<128xf32> to vector<1x128xf32>
    %cst_13 = arith.constant dense<0.000000e+00> : vector<128x128xf32>
    %13 = tpu.matmul %0, %3, %cst_13 {dimension_numbers = #tpu.dot_dimension_numbers<[1], [0], [0], [1], [0, 0, 1, 1], [], []>} : vector<128x3xf32>, vector<3x128xf32>, vector<128x128xf32> -> vector<128x128xf32>
    %14 = vector.broadcast %9 : vector<128x1xf32> to vector<128x128xf32>
    %15 = vector.broadcast %12 : vector<1x128xf32> to vector<128x128xf32>
    %16 = arith.addf %14, %15 : vector<128x128xf32>
    %cst_14 = arith.constant 2.000000e+00 : f32
    %17 = vector.broadcast %cst_14 : f32 to vector<128x128xf32>
    %18 = arith.mulf %17, %13 : vector<128x128xf32>
    %19 = arith.subf %16, %18 : vector<128x128xf32>
    %cst_15 = arith.constant 0.000000e+00 : f32
    %20 = vector.broadcast %cst_15 : f32 to vector<128x128xf32>
    %21 = arith.maximumf %19, %20 : vector<128x128xf32>
    %cst_16 = arith.constant dense<0x7F800000> : vector<128xf32>
    %22 = vector.multi_reduction <minimumf>, %21, %cst_16 [1] : vector<128x128xf32> to vector<128xf32>
    %23 = vector.shape_cast %22 : vector<128xf32> to vector<128x1xf32>
    %cst_17 = arith.constant dense<0x7F800000> : vector<128xf32>
    %24 = vector.multi_reduction <minimumf>, %21, %cst_17 [0] : vector<128x128xf32> to vector<128xf32>
    %25 = vector.shape_cast %24 : vector<128xf32> to vector<1x128xf32>
    %26 = vector.shape_cast %23 : vector<128x1xf32> to vector<1x128x1xf32>
    %cst_18 = arith.constant dense<0.000000e+00> : vector<1xf32>
    %27 = vector.multi_reduction <add>, %26, %cst_18 [1, 2] : vector<1x128x1xf32> to vector<1xf32>
    %28 = vector.shape_cast %27 : vector<1xf32> to vector<1x1x1xf32>
    %29 = vector.extract %28[0, 0, 0] : f32 from vector<1x1x1xf32>
    %30 = vector.broadcast %29 : f32 to vector<1x1xf32>
    %cst_19 = arith.constant 7.812500e-03 : f32
    %31 = vector.broadcast %cst_19 : f32 to vector<1x1xf32>
    %32 = arith.mulf %30, %31 : vector<1x1xf32>
    %33 = vector.shape_cast %25 : vector<1x128xf32> to vector<1x1x128xf32>
    %cst_20 = arith.constant dense<0.000000e+00> : vector<1xf32>
    %34 = vector.multi_reduction <add>, %33, %cst_20 [1, 2] : vector<1x1x128xf32> to vector<1xf32>
    %35 = vector.shape_cast %34 : vector<1xf32> to vector<1x1x1xf32>
    %36 = vector.extract %35[0, 0, 0] : f32 from vector<1x1x1xf32>
    %37 = vector.broadcast %36 : f32 to vector<1x1xf32>
    %cst_21 = arith.constant 7.812500e-03 : f32
    %38 = vector.broadcast %cst_21 : f32 to vector<1x1xf32>
    %39 = arith.mulf %37, %38 : vector<1x1xf32>
    %40 = tpu.iota {dimensions = array<i32: 0>} : vector<128x128xi32>
    %41 = vector.broadcast %25 : vector<1x128xf32> to vector<128x128xf32>
    %42 = arith.cmpf oeq, %21, %41 : vector<128x128xf32>
    %c128_i32 = arith.constant 128 : i32
    %43 = vector.broadcast %c128_i32 : i32 to vector<128x128xi32>
    %44 = arith.select %42, %40, %43 : vector<128x128xi1>, vector<128x128xi32>
    %cst_22 = arith.constant dense<2147483647> : vector<128xi32>
    %45 = vector.multi_reduction <minsi>, %44, %cst_22 [0] : vector<128x128xi32> to vector<128xi32>
    %46 = vector.shape_cast %45 : vector<128xi32> to vector<1x128xi32>
    %47 = vector.broadcast %46 : vector<1x128xi32> to vector<128x128xi32>
    %48 = arith.cmpi eq, %40, %47 : vector<128x128xi32>
    %cst_23 = arith.constant 1.000000e+00 : f32
    %cst_24 = arith.constant 0.000000e+00 : f32
    %49 = vector.broadcast %cst_23 : f32 to vector<128x128xf32>
    %50 = vector.broadcast %cst_24 : f32 to vector<128x128xf32>
    %51 = arith.select %48, %49, %50 : vector<128x128xi1>, vector<128x128xf32>
    %cst_25 = arith.constant dense<0.000000e+00> : vector<3x128xf32>
    %52 = tpu.matmul %1, %51, %cst_25 {dimension_numbers = #tpu.dot_dimension_numbers<[1], [0], [0], [1], [0, 0, 1, 1], [], []>} : vector<3x128xf32>, vector<128x128xf32>, vector<3x128xf32> -> vector<3x128xf32>
    %53 = tpu.iota {dimensions = array<i32: 0>} : vector<128x256xi32>
    %54 = vector.broadcast %4 : vector<1x256xi32> to vector<128x256xi32>
    %55 = arith.cmpi eq, %53, %54 : vector<128x256xi32>
    %cst_26 = arith.constant 1.000000e+00 : f32
    %cst_27 = arith.constant 0.000000e+00 : f32
    %56 = vector.broadcast %cst_26 : f32 to vector<128x256xf32>
    %57 = vector.broadcast %cst_27 : f32 to vector<128x256xf32>
    %58 = arith.select %55, %56, %57 : vector<128x256xi1>, vector<128x256xf32>
    %59 = vector.broadcast %5 : vector<1x256xi32> to vector<128x256xi32>
    %60 = arith.cmpi eq, %53, %59 : vector<128x256xi32>
    %cst_28 = arith.constant 1.000000e+00 : f32
    %cst_29 = arith.constant 0.000000e+00 : f32
    %61 = vector.broadcast %cst_28 : f32 to vector<128x256xf32>
    %62 = vector.broadcast %cst_29 : f32 to vector<128x256xf32>
    %63 = arith.select %60, %61, %62 : vector<128x256xi1>, vector<128x256xf32>
    %64 = arith.subf %58, %63 : vector<128x256xf32>
    %cst_30 = arith.constant dense<0.000000e+00> : vector<3x256xf32>
    %65 = tpu.matmul %3, %64, %cst_30 {dimension_numbers = #tpu.dot_dimension_numbers<[1], [0], [0], [1], [0, 0, 1, 1], [], []>} : vector<3x128xf32>, vector<128x256xf32>, vector<3x256xf32> -> vector<3x256xf32>
    %cst_31 = arith.constant dense<0.000000e+00> : vector<3x256xf32>
    %66 = tpu.matmul %52, %58, %cst_31 {dimension_numbers = #tpu.dot_dimension_numbers<[1], [0], [0], [1], [0, 0, 1, 1], [], []>} : vector<3x128xf32>, vector<128x256xf32>, vector<3x256xf32> -> vector<3x256xf32>
    %67 = arith.mulf %65, %65 : vector<3x256xf32>
    %68 = vector.shape_cast %67 : vector<3x256xf32> to vector<1x3x256xf32>
    %cst_32 = arith.constant dense<0.000000e+00> : vector<1xf32>
    %69 = vector.multi_reduction <add>, %68, %cst_32 [1, 2] : vector<1x3x256xf32> to vector<1xf32>
    %70 = vector.shape_cast %69 : vector<1xf32> to vector<1x1x1xf32>
    %71 = vector.extract %70[0, 0, 0] : f32 from vector<1x1x1xf32>
    %72 = vector.broadcast %71 : f32 to vector<1x1xf32>
    %73 = arith.mulf %66, %66 : vector<3x256xf32>
    %cst_33 = arith.constant dense<0.000000e+00> : vector<256xf32>
    %74 = vector.multi_reduction <add>, %73, %cst_33 [0] : vector<3x256xf32> to vector<256xf32>
    %75 = vector.shape_cast %74 : vector<256xf32> to vector<1x256xf32>
    %cst_34 = arith.constant 1.000000e-24 : f32
    %76 = vector.broadcast %cst_34 : f32 to vector<1x256xf32>
    %77 = arith.maximumf %75, %76 : vector<1x256xf32>
    %78 = math.rsqrt %77 : vector<1x256xf32>
    %79 = arith.mulf %65, %66 : vector<3x256xf32>
    %cst_35 = arith.constant dense<0.000000e+00> : vector<256xf32>
    %80 = vector.multi_reduction <add>, %79, %cst_35 [0] : vector<3x256xf32> to vector<256xf32>
    %81 = vector.shape_cast %80 : vector<256xf32> to vector<1x256xf32>
    %82 = math.absf %81 : vector<1x256xf32>
    %83 = arith.mulf %82, %78 : vector<1x256xf32>
    %84 = vector.shape_cast %83 : vector<1x256xf32> to vector<1x1x256xf32>
    %cst_36 = arith.constant dense<0.000000e+00> : vector<1xf32>
    %85 = vector.multi_reduction <add>, %84, %cst_36 [1, 2] : vector<1x1x256xf32> to vector<1xf32>
    %86 = vector.shape_cast %85 : vector<1xf32> to vector<1x1x1xf32>
    %87 = vector.extract %86[0, 0, 0] : f32 from vector<1x1x1xf32>
    %88 = vector.broadcast %87 : f32 to vector<1x1xf32>
    %89 = arith.mulf %6, %6 : vector<3x256xf32>
    %90 = vector.shape_cast %89 : vector<3x256xf32> to vector<1x3x256xf32>
    %cst_37 = arith.constant dense<0.000000e+00> : vector<1xf32>
    %91 = vector.multi_reduction <add>, %90, %cst_37 [1, 2] : vector<1x3x256xf32> to vector<1xf32>
    %92 = vector.shape_cast %91 : vector<1xf32> to vector<1x1x1xf32>
    %93 = vector.extract %92[0, 0, 0] : f32 from vector<1x1x1xf32>
    %94 = vector.broadcast %93 : f32 to vector<1x1xf32>
    %c0_38 = arith.constant 0 : index
    %c0_39 = arith.constant 0 : index
    %95 = vector.load %arg7[%c0_38, %c0_39] : memref<16x128xf32, #tpu.memory_space<vmem>>, vector<16x128xf32>
    %c0_40 = arith.constant 0 : index
    %c0_41 = arith.constant 0 : index
    %96 = vector.load %arg8[%c0_40, %c0_41] : memref<16x128xf32, #tpu.memory_space<vmem>>, vector<16x128xf32>
    %97 = math.log %96 : vector<16x128xf32>
    %cst_42 = arith.constant -1.000000e+02 : f32
    %98 = vector.broadcast %cst_42 : f32 to vector<16x128xf32>
    %99 = arith.maximumf %97, %98 : vector<16x128xf32>
    %cst_43 = arith.constant 1.000000e+00 : f32
    %100 = vector.broadcast %cst_43 : f32 to vector<16x128xf32>
    %101 = arith.subf %100, %96 : vector<16x128xf32>
    %102 = math.log %101 : vector<16x128xf32>
    %cst_44 = arith.constant -1.000000e+02 : f32
    %103 = vector.broadcast %cst_44 : f32 to vector<16x128xf32>
    %104 = arith.maximumf %102, %103 : vector<16x128xf32>
    %105 = arith.mulf %95, %99 : vector<16x128xf32>
    %cst_45 = arith.constant 1.000000e+00 : f32
    %106 = vector.broadcast %cst_45 : f32 to vector<16x128xf32>
    %107 = arith.subf %106, %95 : vector<16x128xf32>
    %108 = arith.mulf %107, %104 : vector<16x128xf32>
    %109 = arith.addf %105, %108 : vector<16x128xf32>
    %cst_46 = arith.constant 0.000000e+00 : f32
    %110 = vector.broadcast %cst_46 : f32 to vector<16x128xf32>
    %111 = arith.subf %110, %109 : vector<16x128xf32>
    %112 = vector.shape_cast %111 : vector<16x128xf32> to vector<1x16x128xf32>
    %cst_47 = arith.constant dense<0.000000e+00> : vector<1xf32>
    %113 = vector.multi_reduction <add>, %112, %cst_47 [1, 2] : vector<1x16x128xf32> to vector<1xf32>
    %114 = vector.shape_cast %113 : vector<1xf32> to vector<1x1x1xf32>
    %115 = vector.extract %114[0, 0, 0] : f32 from vector<1x1x1xf32>
    %116 = vector.broadcast %115 : f32 to vector<1x1xf32>
    %117 = tpu.iota {dimensions = array<i32: 2>} : vector<1x1x128xi32>
    %c0_i32 = arith.constant 0 : i32
    %118 = vector.broadcast %c0_i32 : i32 to vector<1x1x128xi32>
    %119 = arith.cmpi eq, %117, %118 : vector<1x1x128xi32>
    %cst_48 = arith.constant 0.000000e+00 : f32
    %120 = vector.shape_cast %32 : vector<1x1xf32> to vector<1x1x1xf32>
    %121 = vector.broadcast %120 : vector<1x1x1xf32> to vector<1x1x128xf32>
    %122 = vector.broadcast %cst_48 : f32 to vector<1x1x128xf32>
    %123 = arith.select %119, %121, %122 : vector<1x1x128xi1>, vector<1x1x128xf32>
    %c1_i32 = arith.constant 1 : i32
    %124 = vector.broadcast %c1_i32 : i32 to vector<1x1x128xi32>
    %125 = arith.cmpi eq, %117, %124 : vector<1x1x128xi32>
    %cst_49 = arith.constant 0.000000e+00 : f32
    %126 = vector.shape_cast %39 : vector<1x1xf32> to vector<1x1x1xf32>
    %127 = vector.broadcast %126 : vector<1x1x1xf32> to vector<1x1x128xf32>
    %128 = vector.broadcast %cst_49 : f32 to vector<1x1x128xf32>
    %129 = arith.select %125, %127, %128 : vector<1x1x128xi1>, vector<1x1x128xf32>
    %130 = arith.addf %123, %129 : vector<1x1x128xf32>
    %c2_i32 = arith.constant 2 : i32
    %131 = vector.broadcast %c2_i32 : i32 to vector<1x1x128xi32>
    %132 = arith.cmpi eq, %117, %131 : vector<1x1x128xi32>
    %cst_50 = arith.constant 0.000000e+00 : f32
    %133 = vector.shape_cast %72 : vector<1x1xf32> to vector<1x1x1xf32>
    %134 = vector.broadcast %133 : vector<1x1x1xf32> to vector<1x1x128xf32>
    %135 = vector.broadcast %cst_50 : f32 to vector<1x1x128xf32>
    %136 = arith.select %132, %134, %135 : vector<1x1x128xi1>, vector<1x1x128xf32>
    %137 = arith.addf %130, %136 : vector<1x1x128xf32>
    %c3_i32 = arith.constant 3 : i32
    %138 = vector.broadcast %c3_i32 : i32 to vector<1x1x128xi32>
    %139 = arith.cmpi eq, %117, %138 : vector<1x1x128xi32>
    %cst_51 = arith.constant 0.000000e+00 : f32
    %140 = vector.shape_cast %88 : vector<1x1xf32> to vector<1x1x1xf32>
    %141 = vector.broadcast %140 : vector<1x1x1xf32> to vector<1x1x128xf32>
    %142 = vector.broadcast %cst_51 : f32 to vector<1x1x128xf32>
    %143 = arith.select %139, %141, %142 : vector<1x1x128xi1>, vector<1x1x128xf32>
    %144 = arith.addf %137, %143 : vector<1x1x128xf32>
    %c4_i32 = arith.constant 4 : i32
    %145 = vector.broadcast %c4_i32 : i32 to vector<1x1x128xi32>
    %146 = arith.cmpi eq, %117, %145 : vector<1x1x128xi32>
    %cst_52 = arith.constant 0.000000e+00 : f32
    %147 = vector.shape_cast %94 : vector<1x1xf32> to vector<1x1x1xf32>
    %148 = vector.broadcast %147 : vector<1x1x1xf32> to vector<1x1x128xf32>
    %149 = vector.broadcast %cst_52 : f32 to vector<1x1x128xf32>
    %150 = arith.select %146, %148, %149 : vector<1x1x128xi1>, vector<1x1x128xf32>
    %151 = arith.addf %144, %150 : vector<1x1x128xf32>
    %c5_i32 = arith.constant 5 : i32
    %152 = vector.broadcast %c5_i32 : i32 to vector<1x1x128xi32>
    %153 = arith.cmpi eq, %117, %152 : vector<1x1x128xi32>
    %cst_53 = arith.constant 0.000000e+00 : f32
    %154 = vector.shape_cast %116 : vector<1x1xf32> to vector<1x1x1xf32>
    %155 = vector.broadcast %154 : vector<1x1x1xf32> to vector<1x1x128xf32>
    %156 = vector.broadcast %cst_53 : f32 to vector<1x1x128xf32>
    %157 = arith.select %153, %155, %156 : vector<1x1x128xi1>, vector<1x1x128xf32>
    %158 = arith.addf %151, %157 : vector<1x1x128xf32>
    %c0_54 = arith.constant 0 : index
    %c0_55 = arith.constant 0 : index
    %c0_56 = arith.constant 0 : index
    %159 = vector.load %arg9[%c0_54, %c0_55, %c0_56] : memref<1x1x128xf32, #tpu.memory_space<vmem>>, vector<1x1x128xf32>
    tpu.vector_store %arg9[%c0_54, %c0_55, %c0_56], %158 {strides = array<i32>} : memref<1x1x128xf32, #tpu.memory_space<vmem>>, vector<1x1x128xf32>,
    return
  }
  func.func @transform_0(%arg0: i32) -> (i32, i32) {
    %c0_i32 = arith.constant 0 : i32
    %c0_i32_0 = arith.constant 0 : i32
    %c0_i32_1 = arith.constant 0 : i32
    return %c0_i32, %c0_i32_0 : i32, i32
  }
  func.func @transform_1(%arg0: i32) -> (i32, i32) {
    %c0_i32 = arith.constant 0 : i32
    %c0_i32_0 = arith.constant 0 : i32
    %c0_i32_1 = arith.constant 0 : i32
    return %c0_i32, %c0_i32_0 : i32, i32
  }
  func.func @transform_2(%arg0: i32) -> (i32, i32, i32) {
    %c0_i32 = arith.constant 0 : i32
    %c0_i32_0 = arith.constant 0 : i32
    %c0_i32_1 = arith.constant 0 : i32
    return %arg0, %c0_i32, %c0_i32_0 : i32, i32, i32
  }
  func.func @transform_3(%arg0: i32) -> (i32, i32) {
    %c0_i32 = arith.constant 0 : i32
    %c0_i32_0 = arith.constant 0 : i32
    %c0_i32_1 = arith.constant 0 : i32
    return %c0_i32, %c0_i32_0 : i32, i32
  }
  func.func @transform_4(%arg0: i32) -> (i32, i32) {
    %c0_i32 = arith.constant 0 : i32
    %c0_i32_0 = arith.constant 0 : i32
    %c0_i32_1 = arith.constant 0 : i32
    return %c0_i32, %c0_i32_0 : i32, i32
  }
  func.func @transform_5(%arg0: i32) -> (i32, i32) {
    %c0_i32 = arith.constant 0 : i32
    %c0_i32_0 = arith.constant 0 : i32
    %c0_i32_1 = arith.constant 0 : i32
    return %c0_i32, %c0_i32_0 : i32, i32
  }
  func.func @transform_6(%arg0: i32) -> (i32, i32) {
    %c0_i32 = arith.constant 0 : i32
    %c0_i32_0 = arith.constant 0 : i32
    %c0_i32_1 = arith.constant 0 : i32
    return %c0_i32, %c0_i32_0 : i32, i32
  }
  func.func @transform_7(%arg0: i32) -> (i32, i32) {
    %c0_i32 = arith.constant 0 : i32
    %c0_i32_0 = arith.constant 0 : i32
    %c0_i32_1 = arith.constant 0 : i32
    return %c0_i32, %c0_i32_0 : i32, i32
  }
  func.func @transform_8(%arg0: i32) -> (i32, i32, i32) {
    %c0_i32 = arith.constant 0 : i32
    %c0_i32_0 = arith.constant 0 : i32
    %c0_i32_1 = arith.constant 0 : i32
    return %arg0, %c0_i32, %c0_i32_0 : i32, i32, i32
  }
}

</mosaic_0001>

<llo_original>
// kernel: _lambda_.1
$region0: #{_lambda_.1}
  #allocation0 [shape = 'u32[]', space=smem, size = 0x4, offset = 0x4, fixed_abs, tag = 'smem constant byte address 0x4 - core index']
  #allocation1 [shape = 'u32[144,128]{1,0:T(1,128)}', space=vmem, size = 0x12000, scoped, tag = 'internal scratch']
  %s0 = inlined_call_operand.vmem [shape: f32[128,3], index: 0, kind: input, shape index: {}]
  %s1 = inlined_call_operand.vmem [shape: f32[3,128], index: 1, kind: input, shape index: {}]
  %s2 = inlined_call_operand.vmem [shape: f32[2,3,128], index: 2, kind: input, shape index: {}]
  %s3 = inlined_call_operand.vmem [shape: s32[1,256], index: 3, kind: input, shape index: {}]
  %s4 = inlined_call_operand.vmem [shape: s32[1,256], index: 4, kind: input, shape index: {}]
  %s5 = inlined_call_operand.vmem [shape: f32[3,256], index: 5, kind: input, shape index: {}]
  %s6 = inlined_call_operand.vmem [shape: f32[16,128], index: 6, kind: input, shape index: {}]
  %s7 = inlined_call_operand.vmem [shape: f32[16,128], index: 7, kind: input, shape index: {}]
  %s8 = inlined_call_operand.vmem [shape: f32[2,1,128], index: 8, kind: output, shape index: {}]
  %s9 = sld [smem:[#allocation0]]
  $region65: #{_lambda_.1} parent=0
    _
  %s11 = ssub.s32 1, %s9
  %s12 = scalar_select 0, %s11, %s9
  loop: start=0, step=1, limit=4
  $region2: #{_lambda_.1} parent=0 // loop_pre_header
    _
  $region3: #{_lambda_.1} parent=0 // loop_header
    %s14 = sphi 0, %s18
    %p15 = scmp.ge.s32.totalorder %s14, 4
    %s22 = sphi 0, %s22
    %s24 = sphi 0, %s22
    %s25 = sphi 0, %s24
    %s39 = sphi 0, %s25
    %s43 = sphi 0, %s43
    %s45 = sphi 0, %s43
    %s46 = sphi 0, %s45
    %s60 = sphi 0, %s46
    %s66 = sphi 0, %s68
    %s69 = sphi 0, %s66
    %s70 = sphi 0, %s69
    %s86 = sphi 0, %s70
    %s90 = sphi 0, %s90
    %s92 = sphi 0, %s90
    %s93 = sphi 0, %s92
    %s107 = sphi 0, %s93
    %s111 = sphi 0, %s111
    %s113 = sphi 0, %s111
    %s114 = sphi 0, %s113
    %s128 = sphi 0, %s114
    %s132 = sphi 0, %s132
    %s134 = sphi 0, %s132
    %s135 = sphi 0, %s134
    %s149 = sphi 0, %s135
    %s153 = sphi 0, %s153
    %s155 = sphi 0, %s153
    %s156 = sphi 0, %s155
    %s170 = sphi 0, %s156
    %s174 = sphi 0, %s174
    %s176 = sphi 0, %s174
    %s177 = sphi 0, %s176
    %s191 = sphi 0, %s177
    %s197 = sphi 0, %s199
    %s200 = sphi 0, %s197
    %s201 = sphi 0, %s200
    %s217 = sphi 0, %s201
  $region4: #{_lambda_.1} parent=0 // loop_header_branch
    %17 = sbr.rel (%p15) target = $region8
  $region5: #{_lambda_.1} parent=0 // loop_body
    %s19 = ssub.s32 %s14, 1
    %s20 = ssub.s32 %s14, 2
    %s21 = sadd.s32 %s14, 1
    %s23 = sadd.s32 %s22, 1
    %p26 = scmp.eq.s32.totalorder %s14, 1
    %p27 = scmp.ne.s32.totalorder %s22, %s24
    %p28 = scmp.eq.s32.totalorder %s14, 0
    %p29 = por %p27, %p28
    %p30 = scmp.ne.s32.totalorder %s22, %s24
    %p31 = scmp.eq.s32.totalorder %s19, 1
    %p32 = por %p30, %p31
    %p33 = scmp.ne.s32.totalorder %s24, %s25
    %p34 = scmp.eq.s32.totalorder %s19, 0
    %p35 = por %p33, %p34
    %p36 = scmp.ne.s32.totalorder %s24, %s25
    %p37 = scmp.eq.s32.totalorder %s20, 1
    %p38 = por %p36, %p37
    %p40 = scmp.ne.s32.totalorder %s25, %s39
    %p41 = scmp.eq.s32.totalorder %s20, 0
    %p42 = por %p40, %p41
    %s44 = sadd.s32 %s43, 1
    %p47 = scmp.eq.s32.totalorder %s14, 1
    %p48 = scmp.ne.s32.totalorder %s43, %s45
    %p49 = scmp.eq.s32.totalorder %s14, 0
    %p50 = por %p48, %p49
    %p51 = scmp.ne.s32.totalorder %s43, %s45
    %p52 = scmp.eq.s32.totalorder %s19, 1
    %p53 = por %p51, %p52
    %p54 = scmp.ne.s32.totalorder %s45, %s46
    %p55 = scmp.eq.s32.totalorder %s19, 0
    %p56 = por %p54, %p55
    %p57 = scmp.ne.s32.totalorder %s45, %s46
    %p58 = scmp.eq.s32.totalorder %s20, 1
    %p59 = por %p57, %p58
    %p61 = scmp.ne.s32.totalorder %s46, %s60
    %p62 = scmp.eq.s32.totalorder %s20, 0
    %p63 = por %p61, %p62
    %s64 = ssub.s32 %s14, %s21
    %p65 = scmp.eq.s32.totalorder %s64, 0
    %s67 = sadd.s32 %s66, 1
    %s68 = scalar_select %p65, %s66, %s67
    %p71 = pneg %p65
    %p72 = scmp.eq.s32.totalorder %s14, 1
    %p73 = por %p71, %p72
    %p74 = scmp.ne.s32.totalorder %s66, %s69
    %p75 = scmp.eq.s32.totalorder %s14, 0
    %p76 = por %p74, %p75
    %p77 = scmp.ne.s32.totalorder %s66, %s69
    %p78 = scmp.eq.s32.totalorder %s19, 1
    %p79 = por %p77, %p78
    %p80 = scmp.ne.s32.totalorder %s69, %s70
    %p81 = scmp.eq.s32.totalorder %s19, 0
    %p82 = por %p80, %p81
    %p83 = scmp.ne.s32.totalorder %s69, %s70
    %p84 = scmp.eq.s32.totalorder %s20, 1
    %p85 = por %p83, %p84
    %p87 = scmp.ne.s32.totalorder %s70, %s86
    %p88 = scmp.eq.s32.totalorder %s20, 0
    %p89 = por %p87, %p88
    %s91 = sadd.s32 %s90, 1
    %p94 = scmp.eq.s32.totalorder %s14, 1
    %p95 = scmp.ne.s32.totalorder %s90, %s92
    %p96 = scmp.eq.s32.totalorder %s14, 0
    %p97 = por %p95, %p96
    %p98 = scmp.ne.s32.totalorder %s90, %s92
    %p99 = scmp.eq.s32.totalorder %s19, 1
    %p100 = por %p98, %p99
    %p101 = scmp.ne.s32.totalorder %s92, %s93
    %p102 = scmp.eq.s32.totalorder %s19, 0
    %p103 = por %p101, %p102
    %p104 = scmp.ne.s32.totalorder %s92, %s93
    %p105 = scmp.eq.s32.totalorder %s20, 1
    %p106 = por %p104, %p105
    %p108 = scmp.ne.s32.totalorder %s93, %s107
    %p109 = scmp.eq.s32.totalorder %s20, 0
    %p110 = por %p108, %p109
    %s112 = sadd.s32 %s111, 1
    %p115 = scmp.eq.s32.totalorder %s14, 1
    %p116 = scmp.ne.s32.totalorder %s111, %s113
    %p117 = scmp.eq.s32.totalorder %s14, 0
    %p118 = por %p116, %p117
    %p119 = scmp.ne.s32.totalorder %s111, %s113
    %p120 = scmp.eq.s32.totalorder %s19, 1
    %p121 = por %p119, %p120
    %p122 = scmp.ne.s32.totalorder %s113, %s114
    %p123 = scmp.eq.s32.totalorder %s19, 0
    %p124 = por %p122, %p123
    %p125 = scmp.ne.s32.totalorder %s113, %s114
    %p126 = scmp.eq.s32.totalorder %s20, 1
    %p127 = por %p125, %p126
    %p129 = scmp.ne.s32.totalorder %s114, %s128
    %p130 = scmp.eq.s32.totalorder %s20, 0
    %p131 = por %p129, %p130
    %s133 = sadd.s32 %s132, 1
    %p136 = scmp.eq.s32.totalorder %s14, 1
    %p137 = scmp.ne.s32.totalorder %s132, %s134
    %p138 = scmp.eq.s32.totalorder %s14, 0
    %p139 = por %p137, %p138
    %p140 = scmp.ne.s32.totalorder %s132, %s134
    %p141 = scmp.eq.s32.totalorder %s19, 1
    %p142 = por %p140, %p141
    %p143 = scmp.ne.s32.totalorder %s134, %s135
    %p144 = scmp.eq.s32.totalorder %s19, 0
    %p145 = por %p143, %p144
    %p146 = scmp.ne.s32.totalorder %s134, %s135
    %p147 = scmp.eq.s32.totalorder %s20, 1
    %p148 = por %p146, %p147
    %p150 = scmp.ne.s32.totalorder %s135, %s149
    %p151 = scmp.eq.s32.totalorder %s20, 0
    %p152 = por %p150, %p151
    %s154 = sadd.s32 %s153, 1
    %p157 = scmp.eq.s32.totalorder %s14, 1
    %p158 = scmp.ne.s32.totalorder %s153, %s155
    %p159 = scmp.eq.s32.totalorder %s14, 0
    %p160 = por %p158, %p159
    %p161 = scmp.ne.s32.totalorder %s153, %s155
    %p162 = scmp.eq.s32.totalorder %s19, 1
    %p163 = por %p161, %p162
    %p164 = scmp.ne.s32.totalorder %s155, %s156
    %p165 = scmp.eq.s32.totalorder %s19, 0
    %p166 = por %p164, %p165
    %p167 = scmp.ne.s32.totalorder %s155, %s156
    %p168 = scmp.eq.s32.totalorder %s20, 1
    %p169 = por %p167, %p168
    %p171 = scmp.ne.s32.totalorder %s156, %s170
    %p172 = scmp.eq.s32.totalorder %s20, 0
    %p173 = por %p171, %p172
    %s175 = sadd.s32 %s174, 1
    %p178 = scmp.eq.s32.totalorder %s14, 1
    %p179 = scmp.ne.s32.totalorder %s174, %s176
    %p180 = scmp.eq.s32.totalorder %s14, 0
    %p181 = por %p179, %p180
    %p182 = scmp.ne.s32.totalorder %s174, %s176
    %p183 = scmp.eq.s32.totalorder %s19, 1
    %p184 = por %p182, %p183
    %p185 = scmp.ne.s32.totalorder %s176, %s177
    %p186 = scmp.eq.s32.totalorder %s19, 0
    %p187 = por %p185, %p186
    %p188 = scmp.ne.s32.totalorder %s176, %s177
    %p189 = scmp.eq.s32.totalorder %s20, 1
    %p190 = por %p188, %p189
    %p192 = scmp.ne.s32.totalorder %s177, %s191
    %p193 = scmp.eq.s32.totalorder %s20, 0
    %p194 = por %p192, %p193
    %s195 = ssub.s32 %s14, %s21
    %p196 = scmp.eq.s32.totalorder %s195, 0
    %s198 = sadd.s32 %s197, 1
    %s199 = scalar_select %p196, %s197, %s198
    %p202 = pneg %p196
    %p203 = scmp.eq.s32.totalorder %s14, 1
    %p204 = por %p202, %p203
    %p205 = scmp.ne.s32.totalorder %s197, %s200
    %p206 = scmp.eq.s32.totalorder %s14, 0
    %p207 = por %p205, %p206
    %p208 = scmp.ne.s32.totalorder %s197, %s200
    %p209 = scmp.eq.s32.totalorder %s19, 1
    %p210 = por %p208, %p209
    %p211 = scmp.ne.s32.totalorder %s200, %s201
    %p212 = scmp.eq.s32.totalorder %s19, 0
    %p213 = por %p211, %p212
    %p214 = scmp.ne.s32.totalorder %s200, %s201
    %p215 = scmp.eq.s32.totalorder %s20, 1
    %p216 = por %p214, %p215
    %p218 = scmp.ne.s32.totalorder %s201, %s217
    %p219 = scmp.eq.s32.totalorder %s20, 0
    %p220 = por %p218, %p219
    %p221 = scmp.le.s32.totalorder 1, %s14
    %p222 = scmp.lt.s32.totalorder %s14, 3
    %p223 = pnand %p221, %p222
    %p224 = pneg %p223
    // Predicated region
    $region9: #{_lambda_.1} parent=5 // pred_check
      _
    $region10: #{_lambda_.1} parent=5 // pred_check_branch
      %226 = sbr.rel (%p223) target = $region12
    $region11: #{_lambda_.1} parent=5 // pred_region
      %s227 = ssub.s32 %s14, 1
      // Predicated region
      $region13: #{_lambda_.1} parent=11 // pred_check
        %p228 = pneg %p35
      $region14: #{_lambda_.1} parent=11 // pred_check_branch
        %230 = sbr.rel (%p228) target = $region16
      $region15: #{_lambda_.1} parent=11 // pred_region
        _
      $region16: #{_lambda_.1} parent=11 // pred_fallthru
        _
      // Predicated region
      $region17: #{_lambda_.1} parent=11 // pred_check
        %p231 = pneg %p56
      $region18: #{_lambda_.1} parent=11 // pred_check_branch
        %233 = sbr.rel (%p231) target = $region20
      $region19: #{_lambda_.1} parent=11 // pred_region
        _
      $region20: #{_lambda_.1} parent=11 // pred_fallthru
        _
      // Predicated region
      $region21: #{_lambda_.1} parent=11 // pred_check
        %p234 = pneg %p103
      $region22: #{_lambda_.1} parent=11 // pred_check_branch
        %236 = sbr.rel (%p234) target = $region24
      $region23: #{_lambda_.1} parent=11 // pred_region
        _
      $region24: #{_lambda_.1} parent=11 // pred_fallthru
        _
      // Predicated region
      $region25: #{_lambda_.1} parent=11 // pred_check
        %p237 = pneg %p124
      $region26: #{_lambda_.1} parent=11 // pred_check_branch
        %239 = sbr.rel (%p237) target = $region28
      $region27: #{_lambda_.1} parent=11 // pred_region
        _
      $region28: #{_lambda_.1} parent=11 // pred_fallthru
        _
      // Predicated region
      $region29: #{_lambda_.1} parent=11 // pred_check
        %p240 = pneg %p145
      $region30: #{_lambda_.1} parent=11 // pred_check_branch
        %242 = sbr.rel (%p240) target = $region32
      $region31: #{_lambda_.1} parent=11 // pred_region
        _
      $region32: #{_lambda_.1} parent=11 // pred_fallthru
        _
      // Predicated region
      $region33: #{_lambda_.1} parent=11 // pred_check
        %p243 = pneg %p166
      $region34: #{_lambda_.1} parent=11 // pred_check_branch
        %245 = sbr.rel (%p243) target = $region36
      $region35: #{_lambda_.1} parent=11 // pred_region
        _
      $region36: #{_lambda_.1} parent=11 // pred_fallthru
        _
      // Predicated region
      $region37: #{_lambda_.1} parent=11 // pred_check
        %p246 = pneg %p187
      $region38: #{_lambda_.1} parent=11 // pred_check_branch
        %248 = sbr.rel (%p246) target = $region40
      $region39: #{_lambda_.1} parent=11 // pred_region
        _
      $region40: #{_lambda_.1} parent=11 // pred_fallthru
        _
    $region12: #{_lambda_.1} parent=5 // pred_fallthru
      _
    %p249 = scmp.lt.s32.totalorder %s14, 2
    // Predicated region
    $region41: #{_lambda_.1} parent=5 // pred_check
      %p250 = pneg %p249
    $region42: #{_lambda_.1} parent=5 // pred_check_branch
      %252 = sbr.rel (%p250) target = $region44
    $region43: #{_lambda_.1} parent=5 // pred_region
      // Predicated region
      $region45: #{_lambda_.1} parent=43 // pred_check
        %p253 = pneg %p76
      $region46: #{_lambda_.1} parent=43 // pred_check_branch
        %255 = sbr.rel (%p253) target = $region48
      $region47: #{_lambda_.1} parent=43 // pred_region
        %p256 = scmp.lt.s32.totalorder %s14, 1
        %s257 = scalar_select %p256, %s14, 1
        %s258 = smul.addr %s257, 4
        %s259 = scalar_lea.vmem %s2, %s258
      $region48: #{_lambda_.1} parent=43 // pred_fallthru
        _
    $region44: #{_lambda_.1} parent=5 // pred_fallthru
      _
    %p260 = scmp.le.s32.totalorder 1, %s14
    %p261 = scmp.lt.s32.totalorder %s14, 3
    %p262 = pnand %p260, %p261
    %p263 = pneg %p262
    // Predicated region
    $region49: #{_lambda_.1} parent=5 // pred_check
      _
    $region50: #{_lambda_.1} parent=5 // pred_check_branch
      %265 = sbr.rel (%p262) target = $region52
    $region51: #{_lambda_.1} parent=5 // pred_region
      %s266 = ssub.s32 %s14, 1
      %p267 = pneg %p35
      %p268 = pneg %p32
      %p269 = pneg %p56
      %p270 = pneg %p53
      %p271 = scmp.lt.s32.totalorder %s19, 1
      %s272 = scalar_select %p271, %s19, 1
      %s273 = smul.addr %s272, 4
      %s274 = scalar_lea.vmem %s2, %s273
      %p275 = pneg %p82
      %p276 = pneg %p79
      %p277 = pneg %p103
      %p278 = pneg %p100
      %p279 = pneg %p124
      %p280 = pneg %p121
      %p281 = pneg %p145
      %p282 = pneg %p142
      %p283 = pneg %p166
      %p284 = pneg %p163
      %p285 = pneg %p187
      %p286 = pneg %p184
      %p287 = pneg %p213
      %p288 = pneg %p210
      %p289 = scmp.lt.s32.totalorder %s19, 1
      %s290 = scalar_select %p289, %s19, 1
      %s291 = scalar_lea.vmem %s8, %s290
      %p292 = scmp.lt.s32.totalorder %s19, 1
      %s293 = scalar_select %p292, %s19, 1
      %s294 = smul.addr %s293, 4
      %s295 = scalar_lea.vmem %s2, %s294
      %p296 = scmp.lt.s32.totalorder %s19, 1
      %s297 = scalar_select %p296, %s19, 1
      %s298 = scalar_lea.vmem %s8, %s297
      %v299 = vld [vmem:[%s0] sm:$0xff]
      %v300 = vld [vmem:[%s0 + $0x8] sm:$0xff]
      %v301 = vld [vmem:[%s0 + $0x10] sm:$0xff]
      %v302 = vld [vmem:[%s0 + $0x18] sm:$0xff]
      %v303 = vld [vmem:[%s0 + $0x20] sm:$0xff]
      %v304 = vld [vmem:[%s0 + $0x28] sm:$0xff]
      %v305 = vld [vmem:[%s0 + $0x30] sm:$0xff]
      %v306 = vld [vmem:[%s0 + $0x38] sm:$0xff]
      %v307 = vld [vmem:[%s0 + $0x40] sm:$0xff]
      %v308 = vld [vmem:[%s0 + $0x48] sm:$0xff]
      %v309 = vld [vmem:[%s0 + $0x50] sm:$0xff]
      %v310 = vld [vmem:[%s0 + $0x58] sm:$0xff]
      %v311 = vld [vmem:[%s0 + $0x60] sm:$0xff]
      %v312 = vld [vmem:[%s0 + $0x68] sm:$0xff]
      %v313 = vld [vmem:[%s0 + $0x70] sm:$0xff]
      %v314 = vld [vmem:[%s0 + $0x78] sm:$0xff]
      %v315 = vld [vmem:[%s1] sm:$0x7]
      %v316 = vld [vmem:[%s295] sm:$0x7]
      %v317 = vld [vmem:[%s3] sm:$0x3]
      %v318 = vld [vmem:[%s4] sm:$0x3]
      %v319 = vld [vmem:[%s5] sm:$0x77]
      %v320 = vmul.f32 %v299, %v299
      %v321 = vmul.f32 %v300, %v300
      %v322 = vmul.f32 %v301, %v301
      %v323 = vmul.f32 %v302, %v302
      %v324 = vmul.f32 %v303, %v303
      %v325 = vmul.f32 %v304, %v304
      %v326 = vmul.f32 %v305, %v305
      %v327 = vmul.f32 %v306, %v306
      %v328 = vmul.f32 %v307, %v307
      %v329 = vmul.f32 %v308, %v308
      %v330 = vmul.f32 %v309, %v309
      %v331 = vmul.f32 %v310, %v310
      %v332 = vmul.f32 %v311, %v311
      %v333 = vmul.f32 %v312, %v312
      %v334 = vmul.f32 %v313, %v313
      %v335 = vmul.f32 %v314, %v314
      %vm336 = vcmask 23552
      %v337 = vsel %vm336, %v320, 0.0
      %338 = vadd.xlane.f32.xlu0 %v337
      %v339 = vpop.xlane.xlu0 %338
      %v340 = vsel %vm336, %v321, 0.0
      %341 = vadd.xlane.f32.xlu0 %v340
      %v342 = vpop.xlane.xlu0 %341
      %v343 = vsel %vm336, %v322, 0.0
      %344 = vadd.xlane.f32.xlu0 %v343
      %v345 = vpop.xlane.xlu0 %344
      %v346 = vsel %vm336, %v323, 0.0
      %347 = vadd.xlane.f32.xlu0 %v346
      %v348 = vpop.xlane.xlu0 %347
      %v349 = vsel %vm336, %v324, 0.0
      %350 = vadd.xlane.f32.xlu0 %v349
      %v351 = vpop.xlane.xlu0 %350
      %v352 = vsel %vm336, %v325, 0.0
      %353 = vadd.xlane.f32.xlu0 %v352
      %v354 = vpop.xlane.xlu0 %353
      %v355 = vsel %vm336, %v326, 0.0
      %356 = vadd.xlane.f32.xlu0 %v355
      %v357 = vpop.xlane.xlu0 %356
      %v358 = vsel %vm336, %v327, 0.0
      %359 = vadd.xlane.f32.xlu0 %v358
      %v360 = vpop.xlane.xlu0 %359
      %v361 = vsel %vm336, %v328, 0.0
      %362 = vadd.xlane.f32.xlu0 %v361
      %v363 = vpop.xlane.xlu0 %362
      %v364 = vsel %vm336, %v329, 0.0
      %365 = vadd.xlane.f32.xlu0 %v364
      %v366 = vpop.xlane.xlu0 %365
      %v367 = vsel %vm336, %v330, 0.0
      %368 = vadd.xlane.f32.xlu0 %v367
      %v369 = vpop.xlane.xlu0 %368
      %v370 = vsel %vm336, %v331, 0.0
      %371 = vadd.xlane.f32.xlu0 %v370
      %v372 = vpop.xlane.xlu0 %371
      %v373 = vsel %vm336, %v332, 0.0
      %374 = vadd.xlane.f32.xlu0 %v373
      %v375 = vpop.xlane.xlu0 %374
      %v376 = vsel %vm336, %v333, 0.0
      %377 = vadd.xlane.f32.xlu0 %v376
      %v378 = vpop.xlane.xlu0 %377
      %v379 = vsel %vm336, %v334, 0.0
      %380 = vadd.xlane.f32.xlu0 %v379
      %v381 = vpop.xlane.xlu0 %380
      %v382 = vsel %vm336, %v335, 0.0
      %383 = vadd.xlane.f32.xlu0 %v382
      %v384 = vpop.xlane.xlu0 %383
      %v385 = vmul.f32 %v316, %v316
      %vm386 = vcmask 1042432
      %v387 = vsel %vm386, %v385, 0.0
      %v388 = vrot.slane %v387, 4
      %v389 = vadd.f32 %v387, %v388
      %v390 = vrot.slane %v389, 2
      %v391 = vadd.f32 %v389, %v390
      %v392 = vrot.slane %v391, 1
      %v393 = vadd.f32 %v391, %v392
      %v395 = vsel %vm336, %v299, 0
      %v398 = vsel %vm336, %v300, 0
      %v401 = vsel %vm336, %v301, 0
      %v404 = vsel %vm336, %v302, 0
      %v407 = vsel %vm336, %v303, 0
      %v410 = vsel %vm336, %v304, 0
      %v413 = vsel %vm336, %v305, 0
      %v416 = vsel %vm336, %v306, 0
      %v419 = vsel %vm336, %v307, 0
      %v422 = vsel %vm336, %v308, 0
      %v425 = vsel %vm336, %v309, 0
      %v428 = vsel %vm336, %v310, 0
      %v431 = vsel %vm336, %v311, 0
      %v434 = vsel %vm336, %v312, 0
      %v437 = vsel %vm336, %v313, 0
      %v440 = vsel %vm336, %v314, 0
      %v443 = vsel %vm386, %v316, 0
      %445 = vmatprep.subr.mxu0 0.0
      %446 = vmatpush1.msra.mxu0 %v443
      %447 = vmatprep.subr.mxu0 0.0
      %448 = vmatpush1.msra.mxu0 0.0
      %449 = vmatprep.subr.mxu0 0.0
      %450 = vmatpush1.msra.mxu0 0.0
      %451 = vmatprep.subr.mxu0 0.0
      %452 = vmatpush1.msra.mxu0 0.0
      %453 = vmatprep.subr.mxu0 0.0
      %454 = vmatpush1.msra.mxu0 0.0
      %455 = vmatprep.subr.mxu0 0.0
      %456 = vmatpush1.msra.mxu0 0.0
      %457 = vmatprep.subr.mxu0 0.0
      %458 = vmatpush1.msra.mxu0 0.0
      %459 = vmatprep.subr.mxu0 0.0
      %460 = vmatpush1.msra.mxu0 0.0
      %461 = vmatprep.subr.mxu0 0.0
      %462 = vmatpush1.msra.mxu0 0.0
      %463 = vmatprep.subr.mxu0 0.0
      %464 = vmatpush1.msra.mxu0 0.0
      %465 = vmatprep.subr.mxu0 0.0
      %466 = vmatpush1.msra.mxu0 0.0
      %467 = vmatprep.subr.mxu0 0.0
      %468 = vmatpush1.msra.mxu0 0.0
      %469 = vmatprep.subr.mxu0 0.0
      %470 = vmatpush1.msra.mxu0 0.0
      %471 = vmatprep.subr.mxu0 0.0
      %472 = vmatpush1.msra.mxu0 0.0
      %473 = vmatprep.subr.mxu0 0.0
      %474 = vmatpush1.msra.mxu0 0.0
      %475 = vmatprep.subr.mxu0 0.0
      %476 = vmatpush1.msra.mxu0 0.0
      %477 = vmatprep.subr.mxu0 0.0
      %478 = vmatpush1.msra.mxu0 0.0
      %479 = vmatprep.subr.mxu0 0.0
      %480 = vmatpush1.msra.mxu0 0.0
      %481 = vmatprep.subr.mxu0 0.0
      %482 = vmatpush1.msra.mxu0 0.0
      %483 = vmatprep.subr.mxu0 0.0
      %484 = vmatpush1.msra.mxu0 0.0
      %485 = vmatprep.subr.mxu0 0.0
      %486 = vmatpush1.msra.mxu0 0.0
      %487 = vmatprep.subr.mxu0 0.0
      %488 = vmatpush1.msra.mxu0 0.0
      %489 = vmatprep.subr.mxu0 0.0
      %490 = vmatpush1.msra.mxu0 0.0
      %491 = vmatprep.subr.mxu0 0.0
      %492 = vmatpush1.msra.mxu0 0.0
      %493 = vmatprep.subr.mxu0 0.0
      %494 = vmatpush1.msra.mxu0 0.0
      %495 = vmatprep.subr.mxu0 0.0
      %496 = vmatpush1.msra.mxu0 0.0
      %497 = vmatprep.subr.mxu0 0.0
      %498 = vmatpush1.msra.mxu0 0.0
      %499 = vmatprep.subr.mxu0 0.0
      %500 = vmatpush1.msra.mxu0 0.0
      %501 = vmatprep.subr.mxu0 0.0
      %502 = vmatpush1.msra.mxu0 0.0
      %503 = vmatprep.subr.mxu0 0.0
      %504 = vmatpush1.msra.mxu0 0.0
      %505 = vmatprep.subr.mxu0 0.0
      %506 = vmatpush1.msra.mxu0 0.0
      %507 = vmatprep.subr.mxu0 0.0
      %508 = vmatpush1.msra.mxu0 0.0
      %509 = vmatprep.mubr.f32.mxu0 0.0
      %510 = vmatmul.mubr.f32.gmra.mrb[0].mxu0 %v395
      %v511 = vpop.f32.mrb[0].mxu0
      %v512 = vadd.f32 0.0, %v511
      %v513 = vpop.f32.mrb[0].mxu0
      %514 = vmatprep.mubr.f32.mxu0 0.0
      %515 = vmatmul.mubr.f32.gmra.mrb[0].mxu0 %v398
      %v516 = vpop.f32.mrb[0].mxu0
      %v517 = vadd.f32 0.0, %v516
      %v518 = vpop.f32.mrb[0].mxu0
      %519 = vmatprep.mubr.f32.mxu0 0.0
      %520 = vmatmul.mubr.f32.gmra.mrb[0].mxu0 %v401
      %v521 = vpop.f32.mrb[0].mxu0
      %v522 = vadd.f32 0.0, %v521
      %v523 = vpop.f32.mrb[0].mxu0
      %524 = vmatprep.mubr.f32.mxu0 0.0
      %525 = vmatmul.mubr.f32.gmra.mrb[0].mxu0 %v404
      %v526 = vpop.f32.mrb[0].mxu0
      %v527 = vadd.f32 0.0, %v526
      %v528 = vpop.f32.mrb[0].mxu0
      %529 = vmatprep.mubr.f32.mxu0 0.0
      %530 = vmatmul.mubr.f32.gmra.mrb[0].mxu0 %v407
      %v531 = vpop.f32.mrb[0].mxu0
      %v532 = vadd.f32 0.0, %v531
      %v533 = vpop.f32.mrb[0].mxu0
      %534 = vmatprep.mubr.f32.mxu0 0.0
      %535 = vmatmul.mubr.f32.gmra.mrb[0].mxu0 %v410
      %v536 = vpop.f32.mrb[0].mxu0
      %v537 = vadd.f32 0.0, %v536
      %v538 = vpop.f32.mrb[0].mxu0
      %539 = vmatprep.mubr.f32.mxu0 0.0
      %540 = vmatmul.mubr.f32.gmra.mrb[0].mxu0 %v413
      %v541 = vpop.f32.mrb[0].mxu0
      %v542 = vadd.f32 0.0, %v541
      %v543 = vpop.f32.mrb[0].mxu0
      %544 = vmatprep.mubr.f32.mxu0 0.0
      %545 = vmatmul.mubr.f32.gmra.mrb[0].mxu0 %v416
      %v546 = vpop.f32.mrb[0].mxu0
      %v547 = vadd.f32 0.0, %v546
      %v548 = vpop.f32.mrb[0].mxu0
      %549 = vmatprep.mubr.f32.mxu0 0.0
      %550 = vmatmul.mubr.f32.gmra.mrb[0].mxu0 %v419
      %v551 = vpop.f32.mrb[0].mxu0
      %v552 = vadd.f32 0.0, %v551
      %v553 = vpop.f32.mrb[0].mxu0
      %554 = vmatprep.mubr.f32.mxu0 0.0
      %555 = vmatmul.mubr.f32.gmra.mrb[0].mxu0 %v422
      %v556 = vpop.f32.mrb[0].mxu0
      %v557 = vadd.f32 0.0, %v556
      %v558 = vpop.f32.mrb[0].mxu0
      %559 = vmatprep.mubr.f32.mxu0 0.0
      %560 = vmatmul.mubr.f32.gmra.mrb[0].mxu0 %v425
      %v561 = vpop.f32.mrb[0].mxu0
      %v562 = vadd.f32 0.0, %v561
      %v563 = vpop.f32.mrb[0].mxu0
      %564 = vmatprep.mubr.f32.mxu0 0.0
      %565 = vmatmul.mubr.f32.gmra.mrb[0].mxu0 %v428
      %v566 = vpop.f32.mrb[0].mxu0
      %v567 = vadd.f32 0.0, %v566
      %v568 = vpop.f32.mrb[0].mxu0
      %569 = vmatprep.mubr.f32.mxu0 0.0
      %570 = vmatmul.mubr.f32.gmra.mrb[0].mxu0 %v431
      %v571 = vpop.f32.mrb[0].mxu0
      %v572 = vadd.f32 0.0, %v571
      %v573 = vpop.f32.mrb[0].mxu0
      %574 = vmatprep.mubr.f32.mxu0 0.0
      %575 = vmatmul.mubr.f32.gmra.mrb[0].mxu0 %v434
      %v576 = vpop.f32.mrb[0].mxu0
      %v577 = vadd.f32 0.0, %v576
      %v578 = vpop.f32.mrb[0].mxu0
      %579 = vmatprep.mubr.f32.mxu0 0.0
      %580 = vmatmul.mubr.f32.gmra.mrb[0].mxu0 %v437
      %v581 = vpop.f32.mrb[0].mxu0
      %v582 = vadd.f32 0.0, %v581
      %v583 = vpop.f32.mrb[0].mxu0
      %584 = vmatprep.mubr.f32.mxu0 0.0
      %585 = vmatmul.mubr.f32.gmra.mrb[0].mxu0 %v440
      %v586 = vpop.f32.mrb[0].mxu0
      %v587 = vadd.f32 0.0, %v586
      %v588 = vpop.f32.mrb[0].mxu0
      %589 = vdwg.mxu0
      %v590 = vadd.f32 %v339, %v393
      %v591 = vadd.f32 %v342, %v393
      %v592 = vadd.f32 %v345, %v393
      %v593 = vadd.f32 %v348, %v393
      %v594 = vadd.f32 %v351, %v393
      %v595 = vadd.f32 %v354, %v393
      %v596 = vadd.f32 %v357, %v393
      %v597 = vadd.f32 %v360, %v393
      %v598 = vadd.f32 %v363, %v393
      %v599 = vadd.f32 %v366, %v393
      %v600 = vadd.f32 %v369, %v393
      %v601 = vadd.f32 %v372, %v393
      %v602 = vadd.f32 %v375, %v393
      %v603 = vadd.f32 %v378, %v393
      %v604 = vadd.f32 %v381, %v393
      %v605 = vadd.f32 %v384, %v393
      %v606 = vmul.f32 %v512, 2.0
      %v607 = vmul.f32 %v517, 2.0
      %v608 = vmul.f32 %v522, 2.0
      %v609 = vmul.f32 %v527, 2.0
      %v610 = vmul.f32 %v532, 2.0
      %v611 = vmul.f32 %v537, 2.0
      %v612 = vmul.f32 %v542, 2.0
      %v613 = vmul.f32 %v547, 2.0
      %v614 = vmul.f32 %v552, 2.0
      %v615 = vmul.f32 %v557, 2.0
      %v616 = vmul.f32 %v562, 2.0
      %v617 = vmul.f32 %v567, 2.0
      %v618 = vmul.f32 %v572, 2.0
      %v619 = vmul.f32 %v577, 2.0
      %v620 = vmul.f32 %v582, 2.0
      %v621 = vmul.f32 %v587, 2.0
      %v622 = vsub.f32 %v590, %v606
      %v623 = vsub.f32 %v591, %v607
      %v624 = vsub.f32 %v592, %v608
      %v625 = vsub.f32 %v593, %v609
      %v626 = vsub.f32 %v594, %v610
      %v627 = vsub.f32 %v595, %v611
      %v628 = vsub.f32 %v596, %v612
      %v629 = vsub.f32 %v597, %v613
      %v630 = vsub.f32 %v598, %v614
      %v631 = vsub.f32 %v599, %v615
      %v632 = vsub.f32 %v600, %v616
      %v633 = vsub.f32 %v601, %v617
      %v634 = vsub.f32 %v602, %v618
      %v635 = vsub.f32 %v603, %v619
      %v636 = vsub.f32 %v604, %v620
      %v637 = vsub.f32 %v605, %v621
      %v638 = vmax.f32 %v622, 0.0
      %v639 = vmax.f32 %v623, 0.0
      %v640 = vmax.f32 %v624, 0.0
      %v641 = vmax.f32 %v625, 0.0
      %v642 = vmax.f32 %v626, 0.0
      %v643 = vmax.f32 %v627, 0.0
      %v644 = vmax.f32 %v628, 0.0
      %v645 = vmax.f32 %v629, 0.0
      %v646 = vmax.f32 %v630, 0.0
      %v647 = vmax.f32 %v631, 0.0
      %v648 = vmax.f32 %v632, 0.0
      %v649 = vmax.f32 %v633, 0.0
      %v650 = vmax.f32 %v634, 0.0
      %v651 = vmax.f32 %v635, 0.0
      %v652 = vmax.f32 %v636, 0.0
      %v653 = vmax.f32 %v637, 0.0
      %654 = vmin.xlane.f32.xlu0 %v638
      %v655 = vpop.xlane.xlu0 %654
      %656 = vmin.xlane.f32.xlu0 %v639
      %v657 = vpop.xlane.xlu0 %656
      %658 = vmin.xlane.f32.xlu0 %v640
      %v659 = vpop.xlane.xlu0 %658
      %660 = vmin.xlane.f32.xlu0 %v641
      %v661 = vpop.xlane.xlu0 %660
      %662 = vmin.xlane.f32.xlu0 %v642
      %v663 = vpop.xlane.xlu0 %662
      %664 = vmin.xlane.f32.xlu0 %v643
      %v665 = vpop.xlane.xlu0 %664
      %666 = vmin.xlane.f32.xlu0 %v644
      %v667 = vpop.xlane.xlu0 %666
      %668 = vmin.xlane.f32.xlu0 %v645
      %v669 = vpop.xlane.xlu0 %668
      %670 = vmin.xlane.f32.xlu0 %v646
      %v671 = vpop.xlane.xlu0 %670
      %672 = vmin.xlane.f32.xlu0 %v647
      %v673 = vpop.xlane.xlu0 %672
      %674 = vmin.xlane.f32.xlu0 %v648
      %v675 = vpop.xlane.xlu0 %674
      %676 = vmin.xlane.f32.xlu0 %v649
      %v677 = vpop.xlane.xlu0 %676
      %678 = vmin.xlane.f32.xlu0 %v650
      %v679 = vpop.xlane.xlu0 %678
      %680 = vmin.xlane.f32.xlu0 %v651
      %v681 = vpop.xlane.xlu0 %680
      %682 = vmin.xlane.f32.xlu0 %v652
      %v683 = vpop.xlane.xlu0 %682
      %684 = vmin.xlane.f32.xlu0 %v653
      %v685 = vpop.xlane.xlu0 %684
      %v686 = vmin.f32 %v638, %v642
      %v687 = vmin.f32 %v639, %v643
      %v688 = vmin.f32 %v640, %v644
      %v689 = vmin.f32 %v641, %v645
      %v690 = vmin.f32 %v686, %v646
      %v691 = vmin.f32 %v687, %v647
      %v692 = vmin.f32 %v688, %v648
      %v693 = vmin.f32 %v689, %v649
      %v694 = vmin.f32 %v690, %v650
      %v695 = vmin.f32 %v691, %v651
      %v696 = vmin.f32 %v692, %v652
      %v697 = vmin.f32 %v693, %v653
      %v698 = vmin.f32 %v694, %v695
      %v699 = vmin.f32 %v696, %v697
      %v700 = vmin.f32 %v698, %v699
      %v701 = vrot.slane %v700, 4
      %v702 = vmin.f32 %v700, %v701
      %v703 = vrot.slane %v702, 2
      %v704 = vmin.f32 %v702, %v703
      %v705 = vrot.slane %v704, 1
      %v706 = vmin.f32 %v704, %v705
      %vm707 = vcmask 7168
      %v708 = vsel %vm707, %v655, 0.0
      %v709 = vsel %vm707, %v657, 0.0
      %v710 = vadd.f32 %v708, %v709
      %v711 = vsel %vm707, %v659, 0.0
      %v712 = vadd.f32 %v710, %v711
      %v713 = vsel %vm707, %v661, 0.0
      %v714 = vadd.f32 %v712, %v713
      %v715 = vsel %vm707, %v663, 0.0
      %v716 = vadd.f32 %v714, %v715
      %v717 = vsel %vm707, %v665, 0.0
      %v718 = vadd.f32 %v716, %v717
      %v719 = vsel %vm707, %v667, 0.0
      %v720 = vadd.f32 %v718, %v719
      %v721 = vsel %vm707, %v669, 0.0
      %v722 = vadd.f32 %v720, %v721
      %v723 = vsel %vm707, %v671, 0.0
      %v724 = vadd.f32 %v722, %v723
      %v725 = vsel %vm707, %v673, 0.0
      %v726 = vadd.f32 %v724, %v725
      %v727 = vsel %vm707, %v675, 0.0
      %v728 = vadd.f32 %v726, %v727
      %v729 = vsel %vm707, %v677, 0.0
      %v730 = vadd.f32 %v728, %v729
      %v731 = vsel %vm707, %v679, 0.0
      %v732 = vadd.f32 %v730, %v731
      %v733 = vsel %vm707, %v681, 0.0
      %v734 = vadd.f32 %v732, %v733
      %v735 = vsel %vm707, %v683, 0.0
      %v736 = vadd.f32 %v734, %v735
      %v737 = vsel %vm707, %v685, 0.0
      %v738 = vadd.f32 %v736, %v737
      %739 = vadd.xlane.f32.xlu0 %v738
      %v740 = vpop.xlane.xlu0 %739
      %v741 = vrot.slane %v740, 4
      %v742 = vadd.f32 %v740, %v741
      %v743 = vrot.slane %v742, 2
      %v744 = vadd.f32 %v742, %v743
      %v745 = vrot.slane %v744, 1
      %v746 = vadd.f32 %v744, %v745
      %s747 = vtos %v746
      %v748 = vstv %s747
      %v749 = vmul.f32 %v748, 0.0078125
      %vm750 = vcmask 1040384
      %v751 = vsel %vm750, %v706, 0.0
      %752 = vadd.xlane.f32.xlu0 %v751
      %v753 = vpop.xlane.xlu0 %752
      %v754 = vrot.slane %v753, 4
      %v755 = vadd.f32 %v753, %v754
      %v756 = vrot.slane %v755, 2
      %v757 = vadd.f32 %v755, %v756
      %v758 = vrot.slane %v757, 1
      %v759 = vadd.f32 %v757, %v758
      %s760 = vtos %v759
      %v761 = vstv %s760
      %v762 = vmul.f32 %v761, 0.0078125
      %v763 = vlaneseq
      %v764 = vshrl.u32 %v763, 7
      %v765 = vadd.s32 %v764, 8
      %v766 = vadd.s32 %v764, 16
      %v767 = vadd.s32 %v764, 24
      %v768 = vadd.s32 %v764, 32
      %v769 = vadd.s32 %v764, 40
      %v770 = vadd.s32 %v764, 48
      %v771 = vadd.s32 %v764, 56
      %v772 = vadd.s32 %v764, 64
      %v773 = vadd.s32 %v764, 72
      %v774 = vadd.s32 %v764, 80
      %v775 = vadd.s32 %v764, 88
      %v776 = vadd.s32 %v764, 96
      %v777 = vadd.s32 %v764, 104
      %v778 = vadd.s32 %v764, 112
      %v779 = vadd.s32 %v764, 120
      %vm780 = vcmp.eq.f32.partialorder %v638, %v706
      %vm781 = vcmp.eq.f32.partialorder %v639, %v706
      %vm782 = vcmp.eq.f32.partialorder %v640, %v706
      %vm783 = vcmp.eq.f32.partialorder %v641, %v706
      %vm784 = vcmp.eq.f32.partialorder %v642, %v706
      %vm785 = vcmp.eq.f32.partialorder %v643, %v706
      %vm786 = vcmp.eq.f32.partialorder %v644, %v706
      %vm787 = vcmp.eq.f32.partialorder %v645, %v706
      %vm788 = vcmp.eq.f32.partialorder %v646, %v706
      %vm789 = vcmp.eq.f32.partialorder %v647, %v706
      %vm790 = vcmp.eq.f32.partialorder %v648, %v706
      %vm791 = vcmp.eq.f32.partialorder %v649, %v706
      %vm792 = vcmp.eq.f32.partialorder %v650, %v706
      %vm793 = vcmp.eq.f32.partialorder %v651, %v706
      %vm794 = vcmp.eq.f32.partialorder %v652, %v706
      %vm795 = vcmp.eq.f32.partialorder %v653, %v706
      %v796 = vsel %vm780, %v764, 128
      %v797 = vsel %vm781, %v765, 128
      %v798 = vsel %vm782, %v766, 128
      %v799 = vsel %vm783, %v767, 128
      %v800 = vsel %vm784, %v768, 128
      %v801 = vsel %vm785, %v769, 128
      %v802 = vsel %vm786, %v770, 128
      %v803 = vsel %vm787, %v771, 128
      %v804 = vsel %vm788, %v772, 128
      %v805 = vsel %vm789, %v773, 128
      %v806 = vsel %vm790, %v774, 128
      %v807 = vsel %vm791, %v775, 128
      %v808 = vsel %vm792, %v776, 128
      %v809 = vsel %vm793, %v777, 128
      %v810 = vsel %vm794, %v778, 128
      %v811 = vsel %vm795, %v779, 128
      %vm812 = vcmp.lt.s32.totalorder %v796, %v800
      %v813 = vsel %vm812, %v796, %v800
      %vm814 = vcmp.lt.s32.totalorder %v797, %v801
      %v815 = vsel %vm814, %v797, %v801
      %vm816 = vcmp.lt.s32.totalorder %v798, %v802
      %v817 = vsel %vm816, %v798, %v802
      %vm818 = vcmp.lt.s32.totalorder %v799, %v803
      %v819 = vsel %vm818, %v799, %v803
      %vm820 = vcmp.lt.s32.totalorder %v813, %v804
      %v821 = vsel %vm820, %v813, %v804
      %vm822 = vcmp.lt.s32.totalorder %v815, %v805
      %v823 = vsel %vm822, %v815, %v805
      %vm824 = vcmp.lt.s32.totalorder %v817, %v806
      %v825 = vsel %vm824, %v817, %v806
      %vm826 = vcmp.lt.s32.totalorder %v819, %v807
      %v827 = vsel %vm826, %v819, %v807
      %vm828 = vcmp.lt.s32.totalorder %v821, %v808
      %v829 = vsel %vm828, %v821, %v808
      %vm830 = vcmp.lt.s32.totalorder %v823, %v809
      %v831 = vsel %vm830, %v823, %v809
      %vm832 = vcmp.lt.s32.totalorder %v825, %v810
      %v833 = vsel %vm832, %v825, %v810
      %vm834 = vcmp.lt.s32.totalorder %v827, %v811
      %v835 = vsel %vm834, %v827, %v811
      %vm836 = vcmp.lt.s32.totalorder %v829, %v831
      %v837 = vsel %vm836, %v829, %v831
      %vm838 = vcmp.lt.s32.totalorder %v833, %v835
      %v839 = vsel %vm838, %v833, %v835
      %vm840 = vcmp.lt.s32.totalorder %v837, %v839
      %v841 = vsel %vm840, %v837, %v839
      %v842 = vrot.slane %v841, 4
      %vm843 = vcmp.lt.s32.totalorder %v841, %v842
      %v844 = vsel %vm843, %v841, %v842
      %v845 = vrot.slane %v844, 2
      %vm846 = vcmp.lt.s32.totalorder %v844, %v845
      %v847 = vsel %vm846, %v844, %v845
      %v848 = vrot.slane %v847, 1
      %vm849 = vcmp.lt.s32.totalorder %v847, %v848
      %v850 = vsel %vm849, %v847, %v848
      %vm851 = vcmp.eq.s32.totalorder %v764, %v850
      %vm852 = vcmp.eq.s32.totalorder %v765, %v850
      %vm853 = vcmp.eq.s32.totalorder %v766, %v850
      %vm854 = vcmp.eq.s32.totalorder %v767, %v850
      %vm855 = vcmp.eq.s32.totalorder %v768, %v850
      %vm856 = vcmp.eq.s32.totalorder %v769, %v850
      %vm857 = vcmp.eq.s32.totalorder %v770, %v850
      %vm858 = vcmp.eq.s32.totalorder %v771, %v850
      %vm859 = vcmp.eq.s32.totalorder %v772, %v850
      %vm860 = vcmp.eq.s32.totalorder %v773, %v850
      %vm861 = vcmp.eq.s32.totalorder %v774, %v850
      %vm862 = vcmp.eq.s32.totalorder %v775, %v850
      %vm863 = vcmp.eq.s32.totalorder %v776, %v850
      %vm864 = vcmp.eq.s32.totalorder %v777, %v850
      %vm865 = vcmp.eq.s32.totalorder %v778, %v850
      %vm866 = vcmp.eq.s32.totalorder %v779, %v850
      %v867 = vsel %vm851, 1.0, 0.0
      %v868 = vsel %vm852, 1.0, 0.0
      %v869 = vsel %vm853, 1.0, 0.0
      %v870 = vsel %vm854, 1.0, 0.0
      %v871 = vsel %vm855, 1.0, 0.0
      %v872 = vsel %vm856, 1.0, 0.0
      %v873 = vsel %vm857, 1.0, 0.0
      %v874 = vsel %vm858, 1.0, 0.0
      %v875 = vsel %vm859, 1.0, 0.0
      %v876 = vsel %vm860, 1.0, 0.0
      %v877 = vsel %vm861, 1.0, 0.0
      %v878 = vsel %vm862, 1.0, 0.0
      %v879 = vsel %vm863, 1.0, 0.0
      %v880 = vsel %vm864, 1.0, 0.0
      %v881 = vsel %vm865, 1.0, 0.0
      %v882 = vsel %vm866, 1.0, 0.0
      %883 = vmatprep.subr.mxu0 0.0
      %884 = vmatpush1.msra.mxu0 %v867
      %885 = vmatprep.subr.mxu0 0.0
      %886 = vmatpush1.msra.mxu0 %v868
      %887 = vmatprep.subr.mxu0 0.0
      %888 = vmatpush1.msra.mxu0 %v869
      %889 = vmatprep.subr.mxu0 0.0
      %890 = vmatpush1.msra.mxu0 %v870
      %891 = vmatprep.subr.mxu0 0.0
      %892 = vmatpush1.msra.mxu0 %v871
      %893 = vmatprep.subr.mxu0 0.0
      %894 = vmatpush1.msra.mxu0 %v872
      %895 = vmatprep.subr.mxu0 0.0
      %896 = vmatpush1.msra.mxu0 %v873
      %897 = vmatprep.subr.mxu0 0.0
      %898 = vmatpush1.msra.mxu0 %v874
      %899 = vmatprep.subr.mxu0 0.0
      %900 = vmatpush1.msra.mxu0 %v875
      %901 = vmatprep.subr.mxu0 0.0
      %902 = vmatpush1.msra.mxu0 %v876
      %903 = vmatprep.subr.mxu0 0.0
      %904 = vmatpush1.msra.mxu0 %v877
      %905 = vmatprep.subr.mxu0 0.0
      %906 = vmatpush1.msra.mxu0 %v878
      %907 = vmatprep.subr.mxu0 0.0
      %908 = vmatpush1.msra.mxu0 %v879
      %909 = vmatprep.subr.mxu0 0.0
      %910 = vmatpush1.msra.mxu0 %v880
      %911 = vmatprep.subr.mxu0 0.0
      %912 = vmatpush1.msra.mxu0 %v881
      %913 = vmatprep.subr.mxu0 0.0
      %914 = vmatpush1.msra.mxu0 %v882
      %915 = vmatprep.subr.mxu0 0.0
      %916 = vmatpush1.msra.mxu0 0.0
      %917 = vmatprep.subr.mxu0 0.0
      %918 = vmatpush1.msra.mxu0 0.0
      %919 = vmatprep.subr.mxu0 0.0
      %920 = vmatpush1.msra.mxu0 0.0
      %921 = vmatprep.subr.mxu0 0.0
      %922 = vmatpush1.msra.mxu0 0.0
      %923 = vmatprep.subr.mxu0 0.0
      %924 = vmatpush1.msra.mxu0 0.0
      %925 = vmatprep.subr.mxu0 0.0
      %926 = vmatpush1.msra.mxu0 0.0
      %927 = vmatprep.subr.mxu0 0.0
      %928 = vmatpush1.msra.mxu0 0.0
      %929 = vmatprep.subr.mxu0 0.0
      %930 = vmatpush1.msra.mxu0 0.0
      %931 = vmatprep.subr.mxu0 0.0
      %932 = vmatpush1.msra.mxu0 0.0
      %933 = vmatprep.subr.mxu0 0.0
      %934 = vmatpush1.msra.mxu0 0.0
      %935 = vmatprep.subr.mxu0 0.0
      %936 = vmatpush1.msra.mxu0 0.0
      %937 = vmatprep.subr.mxu0 0.0
      %938 = vmatpush1.msra.mxu0 0.0
      %939 = vmatprep.subr.mxu0 0.0
      %940 = vmatpush1.msra.mxu0 0.0
      %941 = vmatprep.subr.mxu0 0.0
      %942 = vmatpush1.msra.mxu0 0.0
      %943 = vmatprep.subr.mxu0 0.0
      %944 = vmatpush1.msra.mxu0 0.0
      %945 = vmatprep.subr.mxu0 0.0
      %946 = vmatpush1.msra.mxu0 0.0
      %947 = vmatprep.mubr.f32.mxu0 0.0
      %948 = vmatmul.mubr.f32.gmra.mrb[0].mxu0 %v315
      %v949 = vpop.f32.mrb[0].mxu0
      %v950 = vadd.f32 0.0, %v949
      %v951 = vpop.f32.mrb[0].mxu0
      %952 = vdwg.mxu0
      %v953 = vlaneseq
      %v954 = vshrl.u32 %v953, 7
      %v955 = vsub.s32 0, %v954
      %v956 = vrot.slane %v317, %v955
      %v957 = vlaneseq
      %v958 = vshrl.u32 %v957, 7
      %v959 = vsub.s32 1, %v958
      %v960 = vrot.slane %v317, %v959
      %vm961 = vcmp.eq.s32.totalorder %v764, %v956
      %vm962 = vcmp.eq.s32.totalorder %v764, %v960
      %vm963 = vcmp.eq.s32.totalorder %v765, %v956
      %vm964 = vcmp.eq.s32.totalorder %v765, %v960
      %vm965 = vcmp.eq.s32.totalorder %v766, %v956
      %vm966 = vcmp.eq.s32.totalorder %v766, %v960
      %vm967 = vcmp.eq.s32.totalorder %v767, %v956
      %vm968 = vcmp.eq.s32.totalorder %v767, %v960
      %vm969 = vcmp.eq.s32.totalorder %v768, %v956
      %vm970 = vcmp.eq.s32.totalorder %v768, %v960
      %vm971 = vcmp.eq.s32.totalorder %v769, %v956
      %vm972 = vcmp.eq.s32.totalorder %v769, %v960
      %vm973 = vcmp.eq.s32.totalorder %v770, %v956
      %vm974 = vcmp.eq.s32.totalorder %v770, %v960
      %vm975 = vcmp.eq.s32.totalorder %v771, %v956
      %vm976 = vcmp.eq.s32.totalorder %v771, %v960
      %vm977 = vcmp.eq.s32.totalorder %v772, %v956
      %vm978 = vcmp.eq.s32.totalorder %v772, %v960
      %vm979 = vcmp.eq.s32.totalorder %v773, %v956
      %vm980 = vcmp.eq.s32.totalorder %v773, %v960
      %vm981 = vcmp.eq.s32.totalorder %v774, %v956
      %vm982 = vcmp.eq.s32.totalorder %v774, %v960
      %vm983 = vcmp.eq.s32.totalorder %v775, %v956
      %vm984 = vcmp.eq.s32.totalorder %v775, %v960
      %vm985 = vcmp.eq.s32.totalorder %v776, %v956
      %vm986 = vcmp.eq.s32.totalorder %v776, %v960
      %vm987 = vcmp.eq.s32.totalorder %v777, %v956
      %vm988 = vcmp.eq.s32.totalorder %v777, %v960
      %vm989 = vcmp.eq.s32.totalorder %v778, %v956
      %vm990 = vcmp.eq.s32.totalorder %v778, %v960
      %vm991 = vcmp.eq.s32.totalorder %v779, %v956
      %vm992 = vcmp.eq.s32.totalorder %v779, %v960
      %v993 = vsel %vm961, 1.0, 0.0
      %v994 = vsel %vm962, 1.0, 0.0
      %v995 = vsel %vm963, 1.0, 0.0
      %v996 = vsel %vm964, 1.0, 0.0
      %v997 = vsel %vm965, 1.0, 0.0
      %v998 = vsel %vm966, 1.0, 0.0
      %v999 = vsel %vm967, 1.0, 0.0
      %v1000 = vsel %vm968, 1.0, 0.0
      %v1001 = vsel %vm969, 1.0, 0.0
      %v1002 = vsel %vm970, 1.0, 0.0
      %v1003 = vsel %vm971, 1.0, 0.0
      %v1004 = vsel %vm972, 1.0, 0.0
      %v1005 = vsel %vm973, 1.0, 0.0
      %v1006 = vsel %vm974, 1.0, 0.0
      %v1007 = vsel %vm975, 1.0, 0.0
      %v1008 = vsel %vm976, 1.0, 0.0
      %v1009 = vsel %vm977, 1.0, 0.0
      %v1010 = vsel %vm978, 1.0, 0.0
      %v1011 = vsel %vm979, 1.0, 0.0
      %v1012 = vsel %vm980, 1.0, 0.0
      %v1013 = vsel %vm981, 1.0, 0.0
      %v1014 = vsel %vm982, 1.0, 0.0
      %v1015 = vsel %vm983, 1.0, 0.0
      %v1016 = vsel %vm984, 1.0, 0.0
      %v1017 = vsel %vm985, 1.0, 0.0
      %v1018 = vsel %vm986, 1.0, 0.0
      %v1019 = vsel %vm987, 1.0, 0.0
      %v1020 = vsel %vm988, 1.0, 0.0
      %v1021 = vsel %vm989, 1.0, 0.0
      %v1022 = vsel %vm990, 1.0, 0.0
      %v1023 = vsel %vm991, 1.0, 0.0
      %v1024 = vsel %vm992, 1.0, 0.0
      %v1025 = vlaneseq
      %v1026 = vshrl.u32 %v1025, 7
      %v1027 = vsub.s32 0, %v1026
      %v1028 = vrot.slane %v318, %v1027
      %v1029 = vlaneseq
      %v1030 = vshrl.u32 %v1029, 7
      %v1031 = vsub.s32 1, %v1030
      %v1032 = vrot.slane %v318, %v1031
      %vm1033 = vcmp.eq.s32.totalorder %v764, %v1028
      %vm1034 = vcmp.eq.s32.totalorder %v764, %v1032
      %vm1035 = vcmp.eq.s32.totalorder %v765, %v1028
      %vm1036 = vcmp.eq.s32.totalorder %v765, %v1032
      %vm1037 = vcmp.eq.s32.totalorder %v766, %v1028
      %vm1038 = vcmp.eq.s32.totalorder %v766, %v1032
      %vm1039 = vcmp.eq.s32.totalorder %v767, %v1028
      %vm1040 = vcmp.eq.s32.totalorder %v767, %v1032
      %vm1041 = vcmp.eq.s32.totalorder %v768, %v1028
      %vm1042 = vcmp.eq.s32.totalorder %v768, %v1032
      %vm1043 = vcmp.eq.s32.totalorder %v769, %v1028
      %vm1044 = vcmp.eq.s32.totalorder %v769, %v1032
      %vm1045 = vcmp.eq.s32.totalorder %v770, %v1028
      %vm1046 = vcmp.eq.s32.totalorder %v770, %v1032
      %vm1047 = vcmp.eq.s32.totalorder %v771, %v1028
      %vm1048 = vcmp.eq.s32.totalorder %v771, %v1032
      %vm1049 = vcmp.eq.s32.totalorder %v772, %v1028
      %vm1050 = vcmp.eq.s32.totalorder %v772, %v1032
      %vm1051 = vcmp.eq.s32.totalorder %v773, %v1028
      %vm1052 = vcmp.eq.s32.totalorder %v773, %v1032
      %vm1053 = vcmp.eq.s32.totalorder %v774, %v1028
      %vm1054 = vcmp.eq.s32.totalorder %v774, %v1032
      %vm1055 = vcmp.eq.s32.totalorder %v775, %v1028
      %vm1056 = vcmp.eq.s32.totalorder %v775, %v1032
      %vm1057 = vcmp.eq.s32.totalorder %v776, %v1028
      %vm1058 = vcmp.eq.s32.totalorder %v776, %v1032
      %vm1059 = vcmp.eq.s32.totalorder %v777, %v1028
      %vm1060 = vcmp.eq.s32.totalorder %v777, %v1032
      %vm1061 = vcmp.eq.s32.totalorder %v778, %v1028
      %vm1062 = vcmp.eq.s32.totalorder %v778, %v1032
      %vm1063 = vcmp.eq.s32.totalorder %v779, %v1028
      %vm1064 = vcmp.eq.s32.totalorder %v779, %v1032
      %v1065 = vsel %vm1033, 1.0, 0.0
      %v1066 = vsel %vm1034, 1.0, 0.0
      %v1067 = vsel %vm1035, 1.0, 0.0
      %v1068 = vsel %vm1036, 1.0, 0.0
      %v1069 = vsel %vm1037, 1.0, 0.0
      %v1070 = vsel %vm1038, 1.0, 0.0
      %v1071 = vsel %vm1039, 1.0, 0.0
      %v1072 = vsel %vm1040, 1.0, 0.0
      %v1073 = vsel %vm1041, 1.0, 0.0
      %v1074 = vsel %vm1042, 1.0, 0.0
      %v1075 = vsel %vm1043, 1.0, 0.0
      %v1076 = vsel %vm1044, 1.0, 0.0
      %v1077 = vsel %vm1045, 1.0, 0.0
      %v1078 = vsel %vm1046, 1.0, 0.0
      %v1079 = vsel %vm1047, 1.0, 0.0
      %v1080 = vsel %vm1048, 1.0, 0.0
      %v1081 = vsel %vm1049, 1.0, 0.0
      %v1082 = vsel %vm1050, 1.0, 0.0
      %v1083 = vsel %vm1051, 1.0, 0.0
      %v1084 = vsel %vm1052, 1.0, 0.0
      %v1085 = vsel %vm1053, 1.0, 0.0
      %v1086 = vsel %vm1054, 1.0, 0.0
      %v1087 = vsel %vm1055, 1.0, 0.0
      %v1088 = vsel %vm1056, 1.0, 0.0
      %v1089 = vsel %vm1057, 1.0, 0.0
      %v1090 = vsel %vm1058, 1.0, 0.0
      %v1091 = vsel %vm1059, 1.0, 0.0
      %v1092 = vsel %vm1060, 1.0, 0.0
      %v1093 = vsel %vm1061, 1.0, 0.0
      %v1094 = vsel %vm1062, 1.0, 0.0
      %v1095 = vsel %vm1063, 1.0, 0.0
      %v1096 = vsel %vm1064, 1.0, 0.0
      %v1097 = vsub.f32 %v993, %v1065
      %v1098 = vsub.f32 %v994, %v1066
      %v1099 = vsub.f32 %v995, %v1067
      %v1100 = vsub.f32 %v996, %v1068
      %v1101 = vsub.f32 %v997, %v1069
      %v1102 = vsub.f32 %v998, %v1070
      %v1103 = vsub.f32 %v999, %v1071
      %v1104 = vsub.f32 %v1000, %v1072
      %v1105 = vsub.f32 %v1001, %v1073
      %v1106 = vsub.f32 %v1002, %v1074
      %v1107 = vsub.f32 %v1003, %v1075
      %v1108 = vsub.f32 %v1004, %v1076
      %v1109 = vsub.f32 %v1005, %v1077
      %v1110 = vsub.f32 %v1006, %v1078
      %v1111 = vsub.f32 %v1007, %v1079
      %v1112 = vsub.f32 %v1008, %v1080
      %v1113 = vsub.f32 %v1009, %v1081
      %v1114 = vsub.f32 %v1010, %v1082
      %v1115 = vsub.f32 %v1011, %v1083
      %v1116 = vsub.f32 %v1012, %v1084
      %v1117 = vsub.f32 %v1013, %v1085
      %v1118 = vsub.f32 %v1014, %v1086
      %v1119 = vsub.f32 %v1015, %v1087
      %v1120 = vsub.f32 %v1016, %v1088
      %v1121 = vsub.f32 %v1017, %v1089
      %v1122 = vsub.f32 %v1018, %v1090
      %v1123 = vsub.f32 %v1019, %v1091
      %v1124 = vsub.f32 %v1020, %v1092
      %v1125 = vsub.f32 %v1021, %v1093
      %v1126 = vsub.f32 %v1022, %v1094
      %v1127 = vsub.f32 %v1023, %v1095
      %v1128 = vsub.f32 %v1024, %v1096
      %1129 = vmatprep.subr.mxu0 %v1098
      %1130 = vmatpush1.msra.mxu0 %v1097
      %1131 = vmatprep.subr.mxu0 %v1100
      %1132 = vmatpush1.msra.mxu0 %v1099
      %1133 = vmatprep.subr.mxu0 %v1102
      %1134 = vmatpush1.msra.mxu0 %v1101
      %1135 = vmatprep.subr.mxu0 %v1104
      %1136 = vmatpush1.msra.mxu0 %v1103
      %1137 = vmatprep.subr.mxu0 %v1106
      %1138 = vmatpush1.msra.mxu0 %v1105
      %1139 = vmatprep.subr.mxu0 %v1108
      %1140 = vmatpush1.msra.mxu0 %v1107
      %1141 = vmatprep.subr.mxu0 %v1110
      %1142 = vmatpush1.msra.mxu0 %v1109
      %1143 = vmatprep.subr.mxu0 %v1112
      %1144 = vmatpush1.msra.mxu0 %v1111
      %1145 = vmatprep.subr.mxu0 %v1114
      %1146 = vmatpush1.msra.mxu0 %v1113
      %1147 = vmatprep.subr.mxu0 %v1116
      %1148 = vmatpush1.msra.mxu0 %v1115
      %1149 = vmatprep.subr.mxu0 %v1118
      %1150 = vmatpush1.msra.mxu0 %v1117
      %1151 = vmatprep.subr.mxu0 %v1120
      %1152 = vmatpush1.msra.mxu0 %v1119
      %1153 = vmatprep.subr.mxu0 %v1122
      %1154 = vmatpush1.msra.mxu0 %v1121
      %1155 = vmatprep.subr.mxu0 %v1124
      %1156 = vmatpush1.msra.mxu0 %v1123
      %1157 = vmatprep.subr.mxu0 %v1126
      %1158 = vmatpush1.msra.mxu0 %v1125
      %1159 = vmatprep.subr.mxu0 %v1128
      %1160 = vmatpush1.msra.mxu0 %v1127
      %1161 = vmatprep.subr.mxu0 0.0
      %1162 = vmatpush1.msra.mxu0 0.0
      %1163 = vmatprep.subr.mxu0 0.0
      %1164 = vmatpush1.msra.mxu0 0.0
      %1165 = vmatprep.subr.mxu0 0.0
      %1166 = vmatpush1.msra.mxu0 0.0
      %1167 = vmatprep.subr.mxu0 0.0
      %1168 = vmatpush1.msra.mxu0 0.0
      %1169 = vmatprep.subr.mxu0 0.0
      %1170 = vmatpush1.msra.mxu0 0.0
      %1171 = vmatprep.subr.mxu0 0.0
      %1172 = vmatpush1.msra.mxu0 0.0
      %1173 = vmatprep.subr.mxu0 0.0
      %1174 = vmatpush1.msra.mxu0 0.0
      %1175 = vmatprep.subr.mxu0 0.0
      %1176 = vmatpush1.msra.mxu0 0.0
      %1177 = vmatprep.subr.mxu0 0.0
      %1178 = vmatpush1.msra.mxu0 0.0
      %1179 = vmatprep.subr.mxu0 0.0
      %1180 = vmatpush1.msra.mxu0 0.0
      %1181 = vmatprep.subr.mxu0 0.0
      %1182 = vmatpush1.msra.mxu0 0.0
      %1183 = vmatprep.subr.mxu0 0.0
      %1184 = vmatpush1.msra.mxu0 0.0
      %1185 = vmatprep.subr.mxu0 0.0
      %1186 = vmatpush1.msra.mxu0 0.0
      %1187 = vmatprep.subr.mxu0 0.0
      %1188 = vmatpush1.msra.mxu0 0.0
      %1189 = vmatprep.subr.mxu0 0.0
      %1190 = vmatpush1.msra.mxu0 0.0
      %1191 = vmatprep.subr.mxu0 0.0
      %1192 = vmatpush1.msra.mxu0 0.0
      %1193 = vmatprep.mubr.f32.mxu0 0.0
      %1194 = vmatmul.mubr.f32.gmra.mrb[0].mxu0 %v316
      %v1195 = vpop.f32.mrb[0].mxu0
      %v1196 = vadd.f32 0.0, %v1195
      %v1197 = vpop.f32.mrb[0].mxu0
      %v1198 = vadd.f32 0.0, %v1197
      %1199 = vdwg.mxu0
      %1200 = vmatprep.subr.mxu0 %v994
      %1201 = vmatpush1.msra.mxu0 %v993
      %1202 = vmatprep.subr.mxu0 %v996
      %1203 = vmatpush1.msra.mxu0 %v995
      %1204 = vmatprep.subr.mxu0 %v998
      %1205 = vmatpush1.msra.mxu0 %v997
      %1206 = vmatprep.subr.mxu0 %v1000
      %1207 = vmatpush1.msra.mxu0 %v999
      %1208 = vmatprep.subr.mxu0 %v1002
      %1209 = vmatpush1.msra.mxu0 %v1001
      %1210 = vmatprep.subr.mxu0 %v1004
      %1211 = vmatpush1.msra.mxu0 %v1003
      %1212 = vmatprep.subr.mxu0 %v1006
      %1213 = vmatpush1.msra.mxu0 %v1005
      %1214 = vmatprep.subr.mxu0 %v1008
      %1215 = vmatpush1.msra.mxu0 %v1007
      %1216 = vmatprep.subr.mxu0 %v1010
      %1217 = vmatpush1.msra.mxu0 %v1009
      %1218 = vmatprep.subr.mxu0 %v1012
      %1219 = vmatpush1.msra.mxu0 %v1011
      %1220 = vmatprep.subr.mxu0 %v1014
      %1221 = vmatpush1.msra.mxu0 %v1013
      %1222 = vmatprep.subr.mxu0 %v1016
      %1223 = vmatpush1.msra.mxu0 %v1015
      %1224 = vmatprep.subr.mxu0 %v1018
      %1225 = vmatpush1.msra.mxu0 %v1017
      %1226 = vmatprep.subr.mxu0 %v1020
      %1227 = vmatpush1.msra.mxu0 %v1019
      %1228 = vmatprep.subr.mxu0 %v1022
      %1229 = vmatpush1.msra.mxu0 %v1021
      %1230 = vmatprep.subr.mxu0 %v1024
      %1231 = vmatpush1.msra.mxu0 %v1023
      %1232 = vmatprep.subr.mxu0 0.0
      %1233 = vmatpush1.msra.mxu0 0.0
      %1234 = vmatprep.subr.mxu0 0.0
      %1235 = vmatpush1.msra.mxu0 0.0
      %1236 = vmatprep.subr.mxu0 0.0
      %1237 = vmatpush1.msra.mxu0 0.0
      %1238 = vmatprep.subr.mxu0 0.0
      %1239 = vmatpush1.msra.mxu0 0.0
      %1240 = vmatprep.subr.mxu0 0.0
      %1241 = vmatpush1.msra.mxu0 0.0
      %1242 = vmatprep.subr.mxu0 0.0
      %1243 = vmatpush1.msra.mxu0 0.0
      %1244 = vmatprep.subr.mxu0 0.0
      %1245 = vmatpush1.msra.mxu0 0.0
      %1246 = vmatprep.subr.mxu0 0.0
      %1247 = vmatpush1.msra.mxu0 0.0
      %1248 = vmatprep.subr.mxu0 0.0
      %1249 = vmatpush1.msra.mxu0 0.0
      %1250 = vmatprep.subr.mxu0 0.0
      %1251 = vmatpush1.msra.mxu0 0.0
      %1252 = vmatprep.subr.mxu0 0.0
      %1253 = vmatpush1.msra.mxu0 0.0
      %1254 = vmatprep.subr.mxu0 0.0
      %1255 = vmatpush1.msra.mxu0 0.0
      %1256 = vmatprep.subr.mxu0 0.0
      %1257 = vmatpush1.msra.mxu0 0.0
      %1258 = vmatprep.subr.mxu0 0.0
      %1259 = vmatpush1.msra.mxu0 0.0
      %1260 = vmatprep.subr.mxu0 0.0
      %1261 = vmatpush1.msra.mxu0 0.0
      %1262 = vmatprep.subr.mxu0 0.0
      %1263 = vmatpush1.msra.mxu0 0.0
      %1264 = vmatprep.mubr.f32.mxu0 0.0
      %1265 = vmatmul.mubr.f32.gmra.mrb[0].mxu0 %v950
      %v1266 = vpop.f32.mrb[0].mxu0
      %v1267 = vadd.f32 0.0, %v1266
      %v1268 = vpop.f32.mrb[0].mxu0
      %v1269 = vadd.f32 0.0, %v1268
      %1270 = vdwg.mxu0
      %v1271 = vmul.f32 %v1196, %v1196
      %v1272 = vmul.f32 %v1198, %v1198
      %v1273 = vsel %vm386, %v1271, 0.0
      %v1274 = vsel %vm386, %v1272, 0.0
      %v1275 = vadd.f32 %v1273, %v1274
      %1276 = vadd.xlane.f32.xlu0 %v1275
      %v1277 = vpop.xlane.xlu0 %1276
      %v1278 = vrot.slane %v1277, 4
      %v1279 = vadd.f32 %v1277, %v1278
      %v1280 = vrot.slane %v1279, 2
      %v1281 = vadd.f32 %v1279, %v1280
      %v1282 = vrot.slane %v1281, 1
      %v1283 = vadd.f32 %v1281, %v1282
      %s1284 = vtos %v1283
      %v1285 = vmul.f32 %v1267, %v1267
      %v1286 = vmul.f32 %v1269, %v1269
      %v1287 = vsel %vm386, %v1285, 0.0
      %v1288 = vrot.slane %v1287, 4
      %v1289 = vadd.f32 %v1287, %v1288
      %v1290 = vrot.slane %v1289, 2
      %v1291 = vadd.f32 %v1289, %v1290
      %v1292 = vrot.slane %v1291, 1
      %v1293 = vadd.f32 %v1291, %v1292
      %v1294 = vsel %vm386, %v1286, 0.0
      %v1295 = vrot.slane %v1294, 4
      %v1296 = vadd.f32 %v1294, %v1295
      %v1297 = vrot.slane %v1296, 2
      %v1298 = vadd.f32 %v1296, %v1297
      %v1299 = vrot.slane %v1298, 1
      %v1300 = vadd.f32 %v1298, %v1299
      %v1301 = vmax.f32 %v1293, 1e-24
      %v1302 = vmax.f32 %v1300, 1e-24
      %v1303 = vrsqrt.pop %v1301
      %v1304 = vrsqrt.pop %v1302
      %v1305 = vmul.f32 %v1196, %v1267
      %v1306 = vmul.f32 %v1198, %v1269
      %v1307 = vsel %vm386, %v1305, 0.0
      %v1308 = vrot.slane %v1307, 4
      %v1309 = vadd.f32 %v1307, %v1308
      %v1310 = vrot.slane %v1309, 2
      %v1311 = vadd.f32 %v1309, %v1310
      %v1312 = vrot.slane %v1311, 1
      %v1313 = vadd.f32 %v1311, %v1312
      %v1314 = vsel %vm386, %v1306, 0.0
      %v1315 = vrot.slane %v1314, 4
      %v1316 = vadd.f32 %v1314, %v1315
      %v1317 = vrot.slane %v1316, 2
      %v1318 = vadd.f32 %v1316, %v1317
      %v1319 = vrot.slane %v1318, 1
      %v1320 = vadd.f32 %v1318, %v1319
      %v1321 = vand.u32 2147483647, %v1313
      %v1322 = vand.u32 2147483647, %v1320
      %v1323 = vmul.f32 %v1321, %v1303
      %v1324 = vmul.f32 %v1322, %v1304
      %v1325 = vsel %vm750, %v1323, 0.0
      %v1326 = vsel %vm750, %v1324, 0.0
      %v1327 = vadd.f32 %v1325, %v1326
      %1328 = vadd.xlane.f32.xlu0 %v1327
      %v1329 = vpop.xlane.xlu0 %1328
      %v1330 = vrot.slane %v1329, 4
      %v1331 = vadd.f32 %v1329, %v1330
      %v1332 = vrot.slane %v1331, 2
      %v1333 = vadd.f32 %v1331, %v1332
      %v1334 = vrot.slane %v1333, 1
      %v1335 = vadd.f32 %v1333, %v1334
      %s1336 = vtos %v1335
      %v1337 = vmul.f32 %v319, %v319
      %v1339 = vcombine.high %v1337, %v1337
      %v1341 = vsel %vm386, %v1337, 0.0
      %v1342 = vsel %vm386, %v1339, 0.0
      %v1343 = vadd.f32 %v1341, %v1342
      %1344 = vadd.xlane.f32.xlu0 %v1343
      %v1345 = vpop.xlane.xlu0 %1344
      %v1346 = vrot.slane %v1345, 4
      %v1347 = vadd.f32 %v1345, %v1346
      %v1348 = vrot.slane %v1347, 2
      %v1349 = vadd.f32 %v1347, %v1348
      %v1350 = vrot.slane %v1349, 1
      %v1351 = vadd.f32 %v1349, %v1350
      %s1352 = vtos %v1351
      %v1353 = vld [vmem:[%s6] sm:$0xff]
      %v1354 = vld [vmem:[%s6 + $0x8] sm:$0xff]
      %v1355 = vld [vmem:[%s7] sm:$0xff]
      %v1356 = vld [vmem:[%s7 + $0x8] sm:$0xff]
      %v1357 = vlog2.pop %v1355
      %v1358 = vmul.f32 %v1357, 0.6931472
      %v1359 = vlog2.pop %v1356
      %v1360 = vmul.f32 %v1359, 0.6931472
      %v1361 = vmax.f32 %v1358, -100.0
      %v1362 = vmax.f32 %v1360, -100.0
      %v1363 = vsub.f32 1.0, %v1355
      %v1364 = vsub.f32 1.0, %v1356
      %v1365 = vlog2.pop %v1363
      %v1366 = vmul.f32 %v1365, 0.6931472
      %v1367 = vlog2.pop %v1364
      %v1368 = vmul.f32 %v1367, 0.6931472
      %v1369 = vmax.f32 %v1366, -100.0
      %v1370 = vmax.f32 %v1368, -100.0
      %v1371 = vmul.f32 %v1353, %v1361
      %v1372 = vmul.f32 %v1354, %v1362
      %v1373 = vsub.f32 1.0, %v1353
      %v1374 = vsub.f32 1.0, %v1354
      %v1375 = vmul.f32 %v1373, %v1369
      %v1376 = vmul.f32 %v1374, %v1370
      %v1377 = vadd.f32 %v1371, %v1375
      %v1378 = vadd.f32 %v1372, %v1376
      %v1379 = vsub.f32 0.0, %v1377
      %v1380 = vsub.f32 0.0, %v1378
      %v1381 = vadd.f32 %v1379, %v1380
      %1382 = vadd.xlane.f32.xlu0 %v1381
      %v1383 = vpop.xlane.xlu0 %1382
      %v1384 = vrot.slane %v1383, 4
      %v1385 = vadd.f32 %v1383, %v1384
      %v1386 = vrot.slane %v1385, 2
      %v1387 = vadd.f32 %v1385, %v1386
      %v1388 = vrot.slane %v1387, 1
      %v1389 = vadd.f32 %v1387, %v1388
      %s1390 = vtos %v1389
      %v1391 = vlaneseq
      %v1392 = vand.u32 %v1391, 127
      %vm1393 = vcmp.eq.s32.totalorder %v1392, 0
      %v1394 = vsel %vm1393, %v749, 0.0
      %vm1395 = vcmp.eq.s32.totalorder %v1392, 1
      %v1396 = vsel %vm1395, %v762, 0.0
      %v1397 = vadd.f32 %v1394, %v1396
      %vm1398 = vcmp.eq.s32.totalorder %v1392, 2
      %v1399 = vstv %s1284
      %v1400 = vsel %vm1398, %v1399, 0.0
      %v1401 = vadd.f32 %v1397, %v1400
      %vm1402 = vcmp.eq.s32.totalorder %v1392, 3
      %v1403 = vstv %s1336
      %v1404 = vsel %vm1402, %v1403, 0.0
      %v1405 = vadd.f32 %v1401, %v1404
      %vm1406 = vcmp.eq.s32.totalorder %v1392, 4
      %v1407 = vstv %s1352
      %v1408 = vsel %vm1406, %v1407, 0.0
      %v1409 = vadd.f32 %v1405, %v1408
      %vm1410 = vcmp.eq.s32.totalorder %v1392, 5
      %v1411 = vstv %s1390
      %v1412 = vsel %vm1410, %v1411, 0.0
      %v1413 = vadd.f32 %v1409, %v1412
      %1414 = vst [vmem:[%s298] sm:$0x1] %v1413
      %p1415 = scmp.lt.s32.totalorder %s19, 1
      %s1416 = scalar_select %p1415, %s19, 1
      %s1417 = scalar_lea.vmem %s8, %s1416
      // Predicated region
      $region53: #{_lambda_.1} parent=51 // pred_check
        %p1418 = pneg %p210
      $region54: #{_lambda_.1} parent=51 // pred_check_branch
        %1420 = sbr.rel (%p1418) target = $region56
      $region55: #{_lambda_.1} parent=51 // pred_region
        _
      $region56: #{_lambda_.1} parent=51 // pred_fallthru
        _
    $region52: #{_lambda_.1} parent=5 // pred_fallthru
      _
    %p1421 = scmp.le.s32.totalorder 2, %s14
    // Predicated region
    $region57: #{_lambda_.1} parent=5 // pred_check
      %p1422 = pneg %p1421
    $region58: #{_lambda_.1} parent=5 // pred_check_branch
      %1424 = sbr.rel (%p1422) target = $region60
    $region59: #{_lambda_.1} parent=5 // pred_region
      %s1425 = ssub.s32 %s14, 2
      // Predicated region
      $region61: #{_lambda_.1} parent=59 // pred_check
        %p1426 = pneg %p216
      $region62: #{_lambda_.1} parent=59 // pred_check_branch
        %1428 = sbr.rel (%p1426) target = $region64
      $region63: #{_lambda_.1} parent=59 // pred_region
        %p1429 = scmp.lt.s32.totalorder %s20, 1
        %s1430 = scalar_select %p1429, %s20, 1
        %s1431 = scalar_lea.vmem %s8, %s1430
      $region64: #{_lambda_.1} parent=59 // pred_fallthru
        _
    $region60: #{_lambda_.1} parent=5 // pred_fallthru
      _
  $region6: #{_lambda_.1} parent=0 // loop_footer
    %s18 = sadd.s32 1, %s14
  $region7: #{_lambda_.1} parent=0 // loop_footer_branch
    %13 = sbr.rel target = $region3
  $region8: #{_lambda_.1} parent=0 // loop_exit
    _

</llo_original>
